<compile_context>
chip_gen: v6e
topology: v6e:2x2x1
jax: 0.10.0
libtpu: 0.0.40
codegen_flags: <defaults>
</compile_context>

<pallas_src>
import functools

import jax
import jax.numpy as jnp
from jax import lax
from jax.experimental import pallas as pl
from jax.experimental.pallas import tpu as pltpu


def _round_up(v, m):
    return m * ((v + m - 1) // m)


def _net_kernel(x_ref, w1_ref, w2_ref, b2_ref, o_ref, *, n, beta, pow_in_bf16):
    """Fused forward for one (tile_b) row tile.

    x_ref : (tile_b, K_p) bf16, last useful column is all-ones (bias fold)
    w1_ref: (K_p, H_p)    bf16, row d_in holds b1, padded rows/cols are zero
    w2_ref: (H_p, D_p)    bf16, padded rows/cols are zero
    b2_ref: (1, D_p)      f32
    o_ref : (tile_b, D_p) f32
    Both matmuls run bf16 on the MXU with f32 accumulation.
    """
    # Matmul 1 + bias (bias folded into W1's extra row -> no separate add pass).
    h = jnp.dot(x_ref[...], w1_ref[...], preferred_element_type=jnp.float32)
    h = jnp.maximum(h, 0.0)                       # ReLU, f32 (VPU)

    if pow_in_bf16:
        # v6e/v7x: packed bf16 VALU -> power runs at ~2x element rate and the
        # big (tile_b, H_p) intermediate is swept in bf16.  n is a static
        # Python int so this is repeated multiplies, never exp/log.
        hb = h.astype(jnp.bfloat16)
        if n != 1:
            hb = lax.integer_pow(hb, n)
    else:
        # v5e: no bf16 VPU path -> keep epilogue math in f32, cast last.
        if n != 1:
            h = lax.integer_pow(h, n)
        hb = h.astype(jnp.bfloat16)

    # Matmul 2 (bf16 MXU, f32 accumulate), bias, scaled tanh (EUP).
    y = jnp.dot(hb, w2_ref[...], preferred_element_type=jnp.float32)
    y = y + b2_ref[...]
    o_ref[...] = jnp.tanh(beta * y).astype(o_ref.dtype)


def prepare_params(w1, b1, w2, b2):
    """One-time weight preparation (hoisted out of the per-call path).

    w1: (d_in, H)  -- already [in, out] (i.e. transpose of PyTorch Linear.weight)
    b1: (1, H) or (H,)
    w2: (H, d_out) -- [in, out]
    b2: (1, d_out) or (d_out,)
    Returns (w1_aug_bf16, w2_pad_bf16, b2_pad_f32): padded + pre-cast arrays.
    """
    d_in, H = w1.shape
    d_out = w2.shape[1]

    H_p = 128 * pl.cdiv(H, 128)                    # 2000 -> 2048 (lane-dense H)
    d_out_p = max(128, 128 * pl.cdiv(d_out, 128))  # 10   -> 128  (lane-dense out)
    k_p = _round_up(d_in + 1, 8)                   # +1 bias row, sublane-aligned

    # W1 augmented with b1 as an extra row; padded rows/cols are exactly zero,
    # so padded hidden units are relu(0)**n = 0 and padded W2 rows kill them.
    w1_aug = jnp.zeros((k_p, H_p), jnp.float32)
    w1_aug = w1_aug.at[:d_in, :H].set(w1)
    w1_aug = w1_aug.at[d_in, :H].set(jnp.reshape(b1, (-1,)))

    w2_p = jnp.zeros((H_p, d_out_p), jnp.float32).at[:H, :d_out].set(w2)
    b2_p = jnp.zeros((1, d_out_p), jnp.float32).at[0, :d_out].set(
        jnp.reshape(b2, (-1,)))

    return (w1_aug.astype(jnp.bfloat16), w2_p.astype(jnp.bfloat16), b2_p)


@functools.partial(
    jax.jit,
    static_argnames=("d_in", "d_out", "n", "beta", "tile_b", "pow_in_bf16"),
)
def net_forward(x, w1_bf, w2_bf, b2_p, *, d_in, d_out, n=1, beta=0.1,
                tile_b=None, pow_in_bf16=True):
    """x: (B, d_in) float; prepared params from prepare_params().

    Returns (B, d_out) float32.
    """
    B = x.shape[0]
    k_p = w1_bf.shape[0]
    H_p = w1_bf.shape[1]
    d_out_p = w2_bf.shape[1]

    # ---- batch tiling heuristic ---------------------------------------------
    # Small batches: one grid step (rounded to 16 rows for bf16 sublane packing).
    # Larger batches: >= 2 grid steps so the "parallel" axis can shard across
    # v7x's two TensorCores, with up to 512 rows/tile to amortize the ~0.35 us
    # per-step pipeline overhead.  VMEM at tile_b=512: W1 0.16 MiB + W2 0.5 MiB
    # (bf16) + (512,2048) f32 intermediate ~4 MiB -> far under every scoped limit.
    if tile_b is None:
        if B <= 32:
            tile_b = _round_up(B, 16)
        else:
            tile_b = min(512, _round_up(pl.cdiv(B, 2), 16))
    num_tiles = pl.cdiv(B, tile_b)
    B_p = num_tiles * tile_b

    # Per-call x prep (tiny, fused under jit): bf16 cast, zero-pad batch tail
    # and K, set the all-ones bias column.
    x_aug = jnp.zeros((B_p, k_p), jnp.bfloat16)
    x_aug = x_aug.at[:, d_in].set(jnp.bfloat16(1.0))
    x_aug = x_aug.at[:B, :d_in].set(x.astype(jnp.bfloat16))

    kernel = functools.partial(_net_kernel, n=n, beta=beta,
                               pow_in_bf16=pow_in_bf16)
    out = pl.pallas_call(
        kernel,
        out_shape=jax.ShapeDtypeStruct((B_p, d_out_p), jnp.float32),
        grid_spec=pl.GridSpec(
            grid=(num_tiles,),
            in_specs=[
                pl.BlockSpec((tile_b, k_p), lambda i: (i, 0)),      # x tile
                pl.BlockSpec((k_p, H_p), lambda i: (0, 0)),         # W1 (+b1) resident
                pl.BlockSpec((H_p, d_out_p), lambda i: (0, 0)),     # W2 resident
                pl.BlockSpec((1, d_out_p), lambda i: (0, 0)),       # b2 resident
            ],
            out_specs=pl.BlockSpec((tile_b, d_out_p), lambda i: (i, 0)),
        ),
        compiler_params=pltpu.CompilerParams(
            # Batch axis is truly parallel; with num_tiles >= 2 this shards
            # across both v7x TensorCores (no-op on single-TC v5e/v6e).
            dimension_semantics=("parallel",),
        ),
    )(x_aug, w1_bf, w2_bf, b2_p)

    # Strip batch-tail and lane padding.
    return out[:B, :d_out]


def _default_pow_in_bf16():
    # bf16 epilogue power is a win on v6e/v7x (packed bf16 VALU) and a loss on
    # v5e (no bf16 VPU); fall back to True if detection fails.
    try:
        kind = jax.devices()[0].device_kind.lower()
        return "v5" not in kind
    except Exception:  # pragma: no cover
        return True


if __name__ == "__main__":
    # Small, deterministic problem consistent with the module:
    #   input_dim=32, hidden=2000 (fixed by the module), output_dim=10,
    #   batch=16; exercises both n=1 (ReLU) and n=3 paths.
    input_dim, hidden_dim, output_dim = 32, 2000, 10
    batch = 16

    key = jax.random.PRNGKey(0)
    kx, k1, k2, k3, k4 = jax.random.split(key, 5)

    # PyTorch nn.Linear default init: U(-1/sqrt(fan_in), 1/sqrt(fan_in)).
    lim1 = 1.0 / jnp.sqrt(jnp.float32(input_dim))
    lim2 = 1.0 / jnp.sqrt(jnp.float32(hidden_dim))

    x = jax.random.normal(kx, (batch, input_dim), dtype=jnp.float32)
    # Weights stored pre-transposed as [in, out] (= PyTorch Linear.weight.T).
    w1 = jax.random.uniform(k1, (input_dim, hidden_dim), jnp.float32, -lim1, lim1)
    b1 = jax.random.uniform(k2, (1, hidden_dim), jnp.float32, -lim1, lim1)
    w2 = jax.random.uniform(k3, (hidden_dim, output_dim), jnp.float32, -lim2, lim2)
    b2 = jax.random.uniform(k4, (1, output_dim), jnp.float32, -lim2, lim2)

    def ref_forward(x, n, beta):
        h = jnp.maximum(x @ w1 + b1, 0.0) ** n
        return jnp.tanh(beta * (h @ w2 + b2))

    # One-time weight prep (padding + bf16 casts hoisted out of the call path).
    w1_bf, w2_bf, b2_p = prepare_params(w1, b1, w2, b2)
    pow_bf16 = _default_pow_in_bf16()

    # Case 1: default module config (n=1, beta=0.1).
    out1 = jax.block_until_ready(
        net_forward(x, w1_bf, w2_bf, b2_p, d_in=input_dim, d_out=output_dim,
                    n=1, beta=0.1, pow_in_bf16=pow_bf16))
    assert out1.shape == (batch, output_dim)
    # bf16 MXU operands -> loosened tolerance vs. the f32 reference.
    assert jnp.allclose(out1, ref_forward(x, 1, 0.1), atol=2e-2), "n=1 mismatch"

    # Case 2: exercise the n>1 integer-power path (n=3, beta=0.5).
    out2 = jax.block_until_ready(
        net_forward(x, w1_bf, w2_bf, b2_p, d_in=input_dim, d_out=output_dim,
                    n=3, beta=0.5, pow_in_bf16=pow_bf16))
    assert out2.shape == (batch, output_dim)
    assert jnp.allclose(out2, ref_forward(x, 3, 0.5), atol=2e-2), "n=3 mismatch"

    print("KERNEL_OK")
</pallas_src>

<mosaic_0001>
module attributes {stable_mosaic.version = 11 : i64} {
  func.func @_net_kernel(%arg0: i32, %arg1: memref<16x40xbf16, #tpu.memory_space<vmem>>, %arg2: memref<40x2048xbf16, #tpu.memory_space<vmem>>, %arg3: memref<2048x128xbf16, #tpu.memory_space<vmem>>, %arg4: memref<1x128xf32, #tpu.memory_space<vmem>>, %arg5: memref<16x128xf32, #tpu.memory_space<vmem>>) attributes {dimension_semantics = [#tpu.dimension_semantics<parallel>], iteration_bounds = array<i64: 1>, scalar_prefetch = 0 : i64, scratch_operands = 0 : i64, tpu.core_type = #tpu.core_type<tc>, window_params = [{transform_indices = @transform_0, window_bounds = array<i64: 16, 40>}, {pipeline_mode = #tpu.pipeline_mode<synchronous>, transform_indices = @transform_1, window_bounds = array<i64: 40, 2048>}, {pipeline_mode = #tpu.pipeline_mode<synchronous>, transform_indices = @transform_2, window_bounds = array<i64: 2048, 128>}, {pipeline_mode = #tpu.pipeline_mode<synchronous>, transform_indices = @transform_3, window_bounds = array<i64: 1, 128>}, {transform_indices = @transform_4, window_bounds = array<i64: 16, 128>}]} {
    %c0 = arith.constant 0 : index
    %c0_0 = arith.constant 0 : index
    %0 = vector.load %arg1[%c0, %c0_0] : memref<16x40xbf16, #tpu.memory_space<vmem>>, vector<16x40xbf16>
    %c0_1 = arith.constant 0 : index
    %c0_2 = arith.constant 0 : index
    %1 = vector.load %arg2[%c0_1, %c0_2] : memref<40x2048xbf16, #tpu.memory_space<vmem>>, vector<40x2048xbf16>
    %cst = arith.constant dense<0.000000e+00> : vector<16x2048xf32>
    %2 = tpu.matmul %0, %1, %cst {dimension_numbers = #tpu.dot_dimension_numbers<[1], [0], [0], [1], [0, 0, 1, 1], [], []>} : vector<16x40xbf16>, vector<40x2048xbf16>, vector<16x2048xf32> -> vector<16x2048xf32>
    %cst_3 = arith.constant 0.000000e+00 : f32
    %3 = vector.broadcast %cst_3 : f32 to vector<16x2048xf32>
    %4 = arith.maximumf %2, %3 : vector<16x2048xf32>
    %5 = arith.truncf %4 : vector<16x2048xf32> to vector<16x2048xbf16>
    %c0_4 = arith.constant 0 : index
    %c0_5 = arith.constant 0 : index
    %6 = vector.load %arg3[%c0_4, %c0_5] : memref<2048x128xbf16, #tpu.memory_space<vmem>>, vector<2048x128xbf16>
    %cst_6 = arith.constant dense<0.000000e+00> : vector<16x128xf32>
    %7 = tpu.matmul %5, %6, %cst_6 {dimension_numbers = #tpu.dot_dimension_numbers<[1], [0], [0], [1], [0, 0, 1, 1], [], []>} : vector<16x2048xbf16>, vector<2048x128xbf16>, vector<16x128xf32> -> vector<16x128xf32>
    %c0_7 = arith.constant 0 : index
    %c0_8 = arith.constant 0 : index
    %8 = vector.load %arg4[%c0_7, %c0_8] : memref<1x128xf32, #tpu.memory_space<vmem>>, vector<1x128xf32>
    %9 = vector.broadcast %8 : vector<1x128xf32> to vector<16x128xf32>
    %10 = arith.addf %7, %9 : vector<16x128xf32>
    %cst_9 = arith.constant 1.000000e-01 : f32
    %11 = vector.broadcast %cst_9 : f32 to vector<16x128xf32>
    %12 = arith.mulf %11, %10 : vector<16x128xf32>
    %13 = math.tanh %12 : vector<16x128xf32>
    %c0_10 = arith.constant 0 : index
    %c0_11 = arith.constant 0 : index
    %14 = vector.load %arg5[%c0_10, %c0_11] : memref<16x128xf32, #tpu.memory_space<vmem>>, vector<16x128xf32>
    tpu.vector_store %arg5[%c0_10, %c0_11], %13 {strides = array<i32>} : memref<16x128xf32, #tpu.memory_space<vmem>>, vector<16x128xf32>,
    return
  }
  func.func @transform_0(%arg0: i32) -> (i32, i32) {
    %c0_i32 = arith.constant 0 : i32
    %c0_i32_0 = arith.constant 0 : i32
    return %arg0, %c0_i32 : i32, i32
  }
  func.func @transform_1(%arg0: i32) -> (i32, i32) {
    %c0_i32 = arith.constant 0 : i32
    %c0_i32_0 = arith.constant 0 : i32
    %c0_i32_1 = arith.constant 0 : i32
    return %c0_i32, %c0_i32_0 : i32, i32
  }
  func.func @transform_2(%arg0: i32) -> (i32, i32) {
    %c0_i32 = arith.constant 0 : i32
    %c0_i32_0 = arith.constant 0 : i32
    %c0_i32_1 = arith.constant 0 : i32
    return %c0_i32, %c0_i32_0 : i32, i32
  }
  func.func @transform_3(%arg0: i32) -> (i32, i32) {
    %c0_i32 = arith.constant 0 : i32
    %c0_i32_0 = arith.constant 0 : i32
    %c0_i32_1 = arith.constant 0 : i32
    return %c0_i32, %c0_i32_0 : i32, i32
  }
  func.func @transform_4(%arg0: i32) -> (i32, i32) {
    %c0_i32 = arith.constant 0 : i32
    %c0_i32_0 = arith.constant 0 : i32
    return %arg0, %c0_i32 : i32, i32
  }
}

</mosaic_0001>

<llo_original>
// kernel: net_forward.1
$region0: #{net_forward.1}
  #allocation0 [shape = 'u32[]', space=smem, size = 0x4, offset = 0x4, fixed_abs, tag = 'smem constant byte address 0x4 - core index']
  #allocation1 [shape = 'u32[144,128]{1,0:T(1,128)}', space=vmem, size = 0x12000, scoped, tag = 'internal scratch']
  %s0 = inlined_call_operand.vmem [shape: bf16[16,40], index: 0, kind: input, shape index: {}]
  %s1 = inlined_call_operand.hbm [shape: bf16[40,2048], index: 1, kind: input, shape index: {}]
  %s2 = inlined_call_operand.hbm [shape: bf16[2048,128], index: 2, kind: input, shape index: {}]
  %s3 = inlined_call_operand.vmem [shape: f32[1,128], index: 3, kind: input, shape index: {}]
  %s4 = inlined_call_operand.hbm [shape: f32[16,128], index: 4, kind: output, shape index: {}]
  %s5 = sld [smem:[#allocation0]]
  $region34: #{net_forward.1} parent=0
    _
  %s7 = ssub.s32 1, %s5
  %s8 = scalar_select 0, %s7, %s5
  $region1: #{net_forward.1} parent=0
    #allocation2 [shape = 'u8[163840]{0}', space=vmem, size = 0x28000, scoped, tag = 'input window, operand 1, single buffered']
    #allocation3 [shape = 's32[1]{0}', space=sflag, size = 0x4, scoped, tag = 'scoped memory for net_forward.1']
    #allocation4 [shape = 's32[1]{0}', space=sflag, size = 0x4, scoped, tag = 'scoped memory for net_forward.1']
    #allocation5 [shape = 'u8[524288]{0}', space=vmem, size = 0x80000, scoped, tag = 'input window, operand 2, single buffered']
    #allocation6 [shape = 's32[1]{0}', space=sflag, size = 0x4, scoped, tag = 'scoped memory for net_forward.1']
    #allocation7 [shape = 'u8[8192]{0}', space=vmem, size = 0x2000, scoped, tag = 'output window, operand 0, single buffered']
    %9 = vsyncpa [#allocation3], 0
    %10 = vsyncpa [#allocation6], 0
    %11 = vsyncpa [#allocation4], 0
    // Predicated region
    $region2: #{net_forward.1} parent=1 // pred_check
      _
    $region3: #{net_forward.1} parent=1 // pred_check_branch
      %13 = sbr.rel (0) target = $region5
    $region4: #{net_forward.1} parent=1 // pred_region
      _
    $region5: #{net_forward.1} parent=1 // pred_fallthru
      _
    // Predicated region
    $region6: #{net_forward.1} parent=1 // pred_check
      _
    $region7: #{net_forward.1} parent=1 // pred_check_branch
      %15 = sbr.rel (0) target = $region9
    $region8: #{net_forward.1} parent=1 // pred_region
      %s17 = ssub.s32 5120, 5120
      %18 = vsyncadd [#allocation3], %s17
      %s19 = sshll.u32 [#allocation2], 4
      %s20 = int_to_ptr.vmem [resolvable:$true] %s19
      %25 = dma.hbm_to_vmem [thread:$0]  %s1, 5120, %s20, [#allocation3], 1024, 1024, 64
    $region9: #{net_forward.1} parent=1 // pred_fallthru
      _
    // Predicated region
    $region10: #{net_forward.1} parent=1 // pred_check
      _
    $region11: #{net_forward.1} parent=1 // pred_check_branch
      %27 = sbr.rel (0) target = $region13
    $region12: #{net_forward.1} parent=1 // pred_region
      %s29 = ssub.s32 16384, 16384
      %30 = vsyncadd [#allocation6], %s29
      %s31 = sshll.u32 [#allocation5], 4
      %s32 = int_to_ptr.vmem [resolvable:$true] %s31
      %37 = dma.hbm_to_vmem [thread:$0]  %s2, 16384, %s32, [#allocation6], 64, 64, 4
    $region13: #{net_forward.1} parent=1 // pred_fallthru
      _
    // Predicated region
    $region14: #{net_forward.1} parent=1 // pred_check
      _
    $region15: #{net_forward.1} parent=1 // pred_check_branch
      %39 = sbr.rel (0) target = $region17
    $region16: #{net_forward.1} parent=1 // pred_region
      _
    $region17: #{net_forward.1} parent=1 // pred_fallthru
      _
    // Predicated region
    $region18: #{net_forward.1} parent=1 // pred_check
      _
    $region19: #{net_forward.1} parent=1 // pred_check_branch
      %41 = sbr.rel (0) target = $region21
    $region20: #{net_forward.1} parent=1 // pred_region
      %42 = dma.done [#allocation3], 5120
    $region21: #{net_forward.1} parent=1 // pred_fallthru
      _
    // Predicated region
    $region22: #{net_forward.1} parent=1 // pred_check
      _
    $region23: #{net_forward.1} parent=1 // pred_check_branch
      %44 = sbr.rel (0) target = $region25
    $region24: #{net_forward.1} parent=1 // pred_region
      %45 = dma.done [#allocation6], 16384
    $region25: #{net_forward.1} parent=1 // pred_fallthru
      _
    %v47 = vld [vmem:[%s0] sm:$0xf]
    %v48 = vld [vmem:[%s0 + $0x4] sm:$0xf]
    %v49 = vld [vmem:[#allocation2] sm:$0xff]
    %v50 = vld [vmem:[#allocation2 + $0x8] sm:$0xff]
    %v51 = vld [vmem:[#allocation2 + $0x10] sm:$0xff]
    %v52 = vld [vmem:[#allocation2 + $0x18] sm:$0xff]
    %v53 = vld [vmem:[#allocation2 + $0x20] sm:$0xff]
    %v54 = vld [vmem:[#allocation2 + $0x28] sm:$0xff]
    %v55 = vld [vmem:[#allocation2 + $0x30] sm:$0xff]
    %v56 = vld [vmem:[#allocation2 + $0x38] sm:$0xff]
    %v57 = vld [vmem:[#allocation2 + $0x40] sm:$0xff]
    %v58 = vld [vmem:[#allocation2 + $0x48] sm:$0xff]
    %v59 = vld [vmem:[#allocation2 + $0x50] sm:$0xff]
    %v60 = vld [vmem:[#allocation2 + $0x58] sm:$0xff]
    %v61 = vld [vmem:[#allocation2 + $0x60] sm:$0xff]
    %v62 = vld [vmem:[#allocation2 + $0x68] sm:$0xff]
    %v63 = vld [vmem:[#allocation2 + $0x70] sm:$0xff]
    %v64 = vld [vmem:[#allocation2 + $0x78] sm:$0xff]
    %v65 = vld [vmem:[#allocation2 + $0x80] sm:$0xff]
    %v66 = vld [vmem:[#allocation2 + $0x88] sm:$0xff]
    %v67 = vld [vmem:[#allocation2 + $0x90] sm:$0xff]
    %v68 = vld [vmem:[#allocation2 + $0x98] sm:$0xff]
    %v69 = vld [vmem:[#allocation2 + $0xa0] sm:$0xff]
    %v70 = vld [vmem:[#allocation2 + $0xa8] sm:$0xff]
    %v71 = vld [vmem:[#allocation2 + $0xb0] sm:$0xff]
    %v72 = vld [vmem:[#allocation2 + $0xb8] sm:$0xff]
    %v73 = vld [vmem:[#allocation2 + $0xc0] sm:$0xff]
    %v74 = vld [vmem:[#allocation2 + $0xc8] sm:$0xff]
    %v75 = vld [vmem:[#allocation2 + $0xd0] sm:$0xff]
    %v76 = vld [vmem:[#allocation2 + $0xd8] sm:$0xff]
    %v77 = vld [vmem:[#allocation2 + $0xe0] sm:$0xff]
    %v78 = vld [vmem:[#allocation2 + $0xe8] sm:$0xff]
    %v79 = vld [vmem:[#allocation2 + $0xf0] sm:$0xff]
    %v80 = vld [vmem:[#allocation2 + $0xf8] sm:$0xff]
    %v81 = vld [vmem:[#allocation2 + $0x100] sm:$0xff]
    %v82 = vld [vmem:[#allocation2 + $0x108] sm:$0xff]
    %v83 = vld [vmem:[#allocation2 + $0x110] sm:$0xff]
    %v84 = vld [vmem:[#allocation2 + $0x118] sm:$0xff]
    %v85 = vld [vmem:[#allocation2 + $0x120] sm:$0xff]
    %v86 = vld [vmem:[#allocation2 + $0x128] sm:$0xff]
    %v87 = vld [vmem:[#allocation2 + $0x130] sm:$0xff]
    %v88 = vld [vmem:[#allocation2 + $0x138] sm:$0xff]
    %v91 = vunpack.c.l.b16 %v47
    %v92 = vunpack.c.l.b16 %v48
    %v93 = vpack.c.b16 %v92, %v91
    %v134 = vunpack.c.l.b16 %v49
    %v135 = vunpack.c.h.b16 %v49
    %v136 = vunpack.c.l.b16 %v50
    %v137 = vunpack.c.h.b16 %v50
    %v138 = vunpack.c.l.b16 %v51
    %v139 = vunpack.c.h.b16 %v51
    %v140 = vunpack.c.l.b16 %v52
    %v141 = vunpack.c.h.b16 %v52
    %v142 = vunpack.c.l.b16 %v53
    %v143 = vunpack.c.h.b16 %v53
    %v144 = vunpack.c.l.b16 %v54
    %v145 = vunpack.c.h.b16 %v54
    %v146 = vunpack.c.l.b16 %v55
    %v147 = vunpack.c.h.b16 %v55
    %v148 = vunpack.c.l.b16 %v56
    %v149 = vunpack.c.h.b16 %v56
    %v150 = vunpack.c.l.b16 %v57
    %v151 = vunpack.c.h.b16 %v57
    %v152 = vunpack.c.l.b16 %v58
    %v153 = vunpack.c.h.b16 %v58
    %v154 = vunpack.c.l.b16 %v59
    %v155 = vunpack.c.h.b16 %v59
    %v156 = vunpack.c.l.b16 %v60
    %v157 = vunpack.c.h.b16 %v60
    %v158 = vunpack.c.l.b16 %v61
    %v159 = vunpack.c.h.b16 %v61
    %v160 = vunpack.c.l.b16 %v62
    %v161 = vunpack.c.h.b16 %v62
    %v162 = vunpack.c.l.b16 %v63
    %v163 = vunpack.c.h.b16 %v63
    %v164 = vunpack.c.l.b16 %v64
    %v165 = vunpack.c.h.b16 %v64
    %v166 = vunpack.c.l.b16 %v65
    %v167 = vunpack.c.h.b16 %v65
    %v168 = vunpack.c.l.b16 %v66
    %v169 = vunpack.c.h.b16 %v66
    %v170 = vunpack.c.l.b16 %v67
    %v171 = vunpack.c.h.b16 %v67
    %v172 = vunpack.c.l.b16 %v68
    %v173 = vunpack.c.h.b16 %v68
    %v174 = vunpack.c.l.b16 %v69
    %v175 = vunpack.c.h.b16 %v69
    %v176 = vunpack.c.l.b16 %v70
    %v177 = vunpack.c.h.b16 %v70
    %v178 = vunpack.c.l.b16 %v71
    %v179 = vunpack.c.h.b16 %v71
    %v180 = vunpack.c.l.b16 %v72
    %v181 = vunpack.c.h.b16 %v72
    %v182 = vunpack.c.l.b16 %v73
    %v183 = vunpack.c.h.b16 %v73
    %v184 = vunpack.c.l.b16 %v74
    %v185 = vunpack.c.h.b16 %v74
    %v186 = vunpack.c.l.b16 %v75
    %v187 = vunpack.c.h.b16 %v75
    %v188 = vunpack.c.l.b16 %v76
    %v189 = vunpack.c.h.b16 %v76
    %v190 = vunpack.c.l.b16 %v77
    %v191 = vunpack.c.h.b16 %v77
    %v192 = vunpack.c.l.b16 %v78
    %v193 = vunpack.c.h.b16 %v78
    %v194 = vunpack.c.l.b16 %v79
    %v195 = vunpack.c.h.b16 %v79
    %v196 = vunpack.c.l.b16 %v80
    %v197 = vunpack.c.h.b16 %v80
    %v198 = vunpack.c.l.b16 %v81
    %v199 = vunpack.c.h.b16 %v81
    %v200 = vunpack.c.l.b16 %v82
    %v201 = vunpack.c.h.b16 %v82
    %v202 = vunpack.c.l.b16 %v83
    %v203 = vunpack.c.h.b16 %v83
    %v204 = vunpack.c.l.b16 %v84
    %v205 = vunpack.c.h.b16 %v84
    %v206 = vunpack.c.l.b16 %v85
    %v207 = vunpack.c.h.b16 %v85
    %v208 = vunpack.c.l.b16 %v86
    %v209 = vunpack.c.h.b16 %v86
    %v210 = vunpack.c.l.b16 %v87
    %v211 = vunpack.c.h.b16 %v87
    %v212 = vunpack.c.l.b16 %v88
    %v213 = vunpack.c.h.b16 %v88
    %v214 = vpack.c.b16 %v150, %v134
    %v215 = vpack.c.b16 %v151, %v135
    %v216 = vpack.c.b16 %v152, %v136
    %v217 = vpack.c.b16 %v153, %v137
    %v218 = vpack.c.b16 %v154, %v138
    %v219 = vpack.c.b16 %v155, %v139
    %v220 = vpack.c.b16 %v156, %v140
    %v221 = vpack.c.b16 %v157, %v141
    %v222 = vpack.c.b16 %v158, %v142
    %v223 = vpack.c.b16 %v159, %v143
    %v224 = vpack.c.b16 %v160, %v144
    %v225 = vpack.c.b16 %v161, %v145
    %v226 = vpack.c.b16 %v162, %v146
    %v227 = vpack.c.b16 %v163, %v147
    %v228 = vpack.c.b16 %v164, %v148
    %v229 = vpack.c.b16 %v165, %v149
    %v230 = vpack.c.b16 %v182, %v166
    %v231 = vpack.c.b16 %v183, %v167
    %v232 = vpack.c.b16 %v184, %v168
    %v233 = vpack.c.b16 %v185, %v169
    %v234 = vpack.c.b16 %v186, %v170
    %v235 = vpack.c.b16 %v187, %v171
    %v236 = vpack.c.b16 %v188, %v172
    %v237 = vpack.c.b16 %v189, %v173
    %v238 = vpack.c.b16 %v190, %v174
    %v239 = vpack.c.b16 %v191, %v175
    %v240 = vpack.c.b16 %v192, %v176
    %v241 = vpack.c.b16 %v193, %v177
    %v242 = vpack.c.b16 %v194, %v178
    %v243 = vpack.c.b16 %v195, %v179
    %v244 = vpack.c.b16 %v196, %v180
    %v245 = vpack.c.b16 %v197, %v181
    %v246 = vpack.c.b16 %v198, %v198
    %v247 = vpack.c.b16 %v199, %v199
    %v248 = vpack.c.b16 %v200, %v200
    %v249 = vpack.c.b16 %v201, %v201
    %v250 = vpack.c.b16 %v202, %v202
    %v251 = vpack.c.b16 %v203, %v203
    %v252 = vpack.c.b16 %v204, %v204
    %v253 = vpack.c.b16 %v205, %v205
    %v254 = vpack.c.b16 %v206, %v206
    %v255 = vpack.c.b16 %v207, %v207
    %v256 = vpack.c.b16 %v208, %v208
    %v257 = vpack.c.b16 %v209, %v209
    %v258 = vpack.c.b16 %v210, %v210
    %v259 = vpack.c.b16 %v211, %v211
    %v260 = vpack.c.b16 %v212, %v212
    %v261 = vpack.c.b16 %v213, %v213
    %vm294 = vcmask 326656
    %v296 = vsel %vm294, %v93, 0
    %vm298 = vcmask 1043456
    %v300 = vsel %vm298, %v246, 0
    %v303 = vsel %vm298, %v247, 0
    %v306 = vsel %vm298, %v248, 0
    %v309 = vsel %vm298, %v249, 0
    %v312 = vsel %vm298, %v250, 0
    %v315 = vsel %vm298, %v251, 0
    %v318 = vsel %vm298, %v252, 0
    %v321 = vsel %vm298, %v253, 0
    %v324 = vsel %vm298, %v254, 0
    %v327 = vsel %vm298, %v255, 0
    %v330 = vsel %vm298, %v256, 0
    %v333 = vsel %vm298, %v257, 0
    %v336 = vsel %vm298, %v258, 0
    %v339 = vsel %vm298, %v259, 0
    %v342 = vsel %vm298, %v260, 0
    %v345 = vsel %vm298, %v261, 0
    %347 = vmatprep.subr.bf16.mxu0 0
    %348 = vmatpush1.bf16.msra.mxu0 0
    %349 = vmatprep.subr.bf16.mxu0 0
    %350 = vmatpush1.bf16.msra.mxu0 0
    %351 = vmatprep.subr.bf16.mxu0 0
    %352 = vmatpush1.bf16.msra.mxu0 0
    %353 = vmatprep.subr.bf16.mxu0 0
    %354 = vmatpush1.bf16.msra.mxu0 0
    %355 = vmatprep.subr.bf16.mxu0 0
    %356 = vmatpush1.bf16.msra.mxu0 0
    %357 = vmatprep.subr.bf16.mxu0 %v303
    %358 = vmatpush1.bf16.msra.mxu0 %v300
    %359 = vmatprep.subr.bf16.mxu0 %v231
    %360 = vmatpush1.bf16.msra.mxu0 %v230
    %361 = vmatprep.subr.bf16.mxu0 %v215
    %362 = vmatpush1.bf16.msra.mxu0 %v214
    %363 = vmatprep.subr.bf16.mxu0 0
    %364 = vmatpush2.bf16.msra.mxu0 0
    %365 = vmatprep.subr.bf16.mxu0 0
    %366 = vmatpush2.bf16.msra.mxu0 0
    %367 = vmatprep.subr.bf16.mxu0 0
    %368 = vmatpush2.bf16.msra.mxu0 0
    %369 = vmatprep.subr.bf16.mxu0 0
    %370 = vmatpush2.bf16.msra.mxu0 0
    %371 = vmatprep.subr.bf16.mxu0 0
    %372 = vmatpush2.bf16.msra.mxu0 0
    %373 = vmatprep.subr.bf16.mxu0 0
    %374 = vmatpush2.bf16.msra.mxu0 0
    %375 = vmatprep.subr.bf16.mxu0 0
    %376 = vmatpush2.bf16.msra.mxu0 0
    %377 = vmatprep.subr.bf16.mxu0 0
    %378 = vmatpush2.bf16.msra.mxu0 0
    %379 = vmatprep.mubr.bf16.mxu0 0
    %380 = vmatmul.mubr.bf16.gmra.mxu0 %v296
    %v381 = vpop.f32.mrf.mxu0
    %v382 = vadd.f32 0.0, %v381
    %v383 = vpop.f32.mrf.mxu0
    %v384 = vadd.f32 0.0, %v383
    %v385 = vpop.f32.mrf.mxu0
    %v386 = vadd.f32 0.0, %v385
    %v387 = vpop.f32.mrf.mxu0
    %v388 = vadd.f32 0.0, %v387
    %389 = vdwg.mxu0
    %390 = vmatprep.subr.bf16.mxu0 0
    %391 = vmatpush1.bf16.msra.mxu0 0
    %392 = vmatprep.subr.bf16.mxu0 0
    %393 = vmatpush1.bf16.msra.mxu0 0
    %394 = vmatprep.subr.bf16.mxu0 0
    %395 = vmatpush1.bf16.msra.mxu0 0
    %396 = vmatprep.subr.bf16.mxu0 0
    %397 = vmatpush1.bf16.msra.mxu0 0
    %398 = vmatprep.subr.bf16.mxu0 0
    %399 = vmatpush1.bf16.msra.mxu0 0
    %400 = vmatprep.subr.bf16.mxu0 %v309
    %401 = vmatpush1.bf16.msra.mxu0 %v306
    %402 = vmatprep.subr.bf16.mxu0 %v233
    %403 = vmatpush1.bf16.msra.mxu0 %v232
    %404 = vmatprep.subr.bf16.mxu0 %v217
    %405 = vmatpush1.bf16.msra.mxu0 %v216
    %406 = vmatprep.subr.bf16.mxu0 0
    %407 = vmatpush2.bf16.msra.mxu0 0
    %408 = vmatprep.subr.bf16.mxu0 0
    %409 = vmatpush2.bf16.msra.mxu0 0
    %410 = vmatprep.subr.bf16.mxu0 0
    %411 = vmatpush2.bf16.msra.mxu0 0
    %412 = vmatprep.subr.bf16.mxu0 0
    %413 = vmatpush2.bf16.msra.mxu0 0
    %414 = vmatprep.subr.bf16.mxu0 0
    %415 = vmatpush2.bf16.msra.mxu0 0
    %416 = vmatprep.subr.bf16.mxu0 0
    %417 = vmatpush2.bf16.msra.mxu0 0
    %418 = vmatprep.subr.bf16.mxu0 0
    %419 = vmatpush2.bf16.msra.mxu0 0
    %420 = vmatprep.subr.bf16.mxu0 0
    %421 = vmatpush2.bf16.msra.mxu0 0
    %422 = vmatprep.mubr.bf16.mxu0 0
    %423 = vmatmul.mubr.bf16.gmra.mxu0 %v296
    %v424 = vpop.f32.mrf.mxu0
    %v425 = vadd.f32 0.0, %v424
    %v426 = vpop.f32.mrf.mxu0
    %v427 = vadd.f32 0.0, %v426
    %v428 = vpop.f32.mrf.mxu0
    %v429 = vadd.f32 0.0, %v428
    %v430 = vpop.f32.mrf.mxu0
    %v431 = vadd.f32 0.0, %v430
    %432 = vdwg.mxu0
    %433 = vmatprep.subr.bf16.mxu0 0
    %434 = vmatpush1.bf16.msra.mxu0 0
    %435 = vmatprep.subr.bf16.mxu0 0
    %436 = vmatpush1.bf16.msra.mxu0 0
    %437 = vmatprep.subr.bf16.mxu0 0
    %438 = vmatpush1.bf16.msra.mxu0 0
    %439 = vmatprep.subr.bf16.mxu0 0
    %440 = vmatpush1.bf16.msra.mxu0 0
    %441 = vmatprep.subr.bf16.mxu0 0
    %442 = vmatpush1.bf16.msra.mxu0 0
    %443 = vmatprep.subr.bf16.mxu0 %v315
    %444 = vmatpush1.bf16.msra.mxu0 %v312
    %445 = vmatprep.subr.bf16.mxu0 %v235
    %446 = vmatpush1.bf16.msra.mxu0 %v234
    %447 = vmatprep.subr.bf16.mxu0 %v219
    %448 = vmatpush1.bf16.msra.mxu0 %v218
    %449 = vmatprep.subr.bf16.mxu0 0
    %450 = vmatpush2.bf16.msra.mxu0 0
    %451 = vmatprep.subr.bf16.mxu0 0
    %452 = vmatpush2.bf16.msra.mxu0 0
    %453 = vmatprep.subr.bf16.mxu0 0
    %454 = vmatpush2.bf16.msra.mxu0 0
    %455 = vmatprep.subr.bf16.mxu0 0
    %456 = vmatpush2.bf16.msra.mxu0 0
    %457 = vmatprep.subr.bf16.mxu0 0
    %458 = vmatpush2.bf16.msra.mxu0 0
    %459 = vmatprep.subr.bf16.mxu0 0
    %460 = vmatpush2.bf16.msra.mxu0 0
    %461 = vmatprep.subr.bf16.mxu0 0
    %462 = vmatpush2.bf16.msra.mxu0 0
    %463 = vmatprep.subr.bf16.mxu0 0
    %464 = vmatpush2.bf16.msra.mxu0 0
    %465 = vmatprep.mubr.bf16.mxu0 0
    %466 = vmatmul.mubr.bf16.gmra.mxu0 %v296
    %v467 = vpop.f32.mrf.mxu0
    %v468 = vadd.f32 0.0, %v467
    %v469 = vpop.f32.mrf.mxu0
    %v470 = vadd.f32 0.0, %v469
    %v471 = vpop.f32.mrf.mxu0
    %v472 = vadd.f32 0.0, %v471
    %v473 = vpop.f32.mrf.mxu0
    %v474 = vadd.f32 0.0, %v473
    %475 = vdwg.mxu0
    %476 = vmatprep.subr.bf16.mxu0 0
    %477 = vmatpush1.bf16.msra.mxu0 0
    %478 = vmatprep.subr.bf16.mxu0 0
    %479 = vmatpush1.bf16.msra.mxu0 0
    %480 = vmatprep.subr.bf16.mxu0 0
    %481 = vmatpush1.bf16.msra.mxu0 0
    %482 = vmatprep.subr.bf16.mxu0 0
    %483 = vmatpush1.bf16.msra.mxu0 0
    %484 = vmatprep.subr.bf16.mxu0 0
    %485 = vmatpush1.bf16.msra.mxu0 0
    %486 = vmatprep.subr.bf16.mxu0 %v321
    %487 = vmatpush1.bf16.msra.mxu0 %v318
    %488 = vmatprep.subr.bf16.mxu0 %v237
    %489 = vmatpush1.bf16.msra.mxu0 %v236
    %490 = vmatprep.subr.bf16.mxu0 %v221
    %491 = vmatpush1.bf16.msra.mxu0 %v220
    %492 = vmatprep.subr.bf16.mxu0 0
    %493 = vmatpush2.bf16.msra.mxu0 0
    %494 = vmatprep.subr.bf16.mxu0 0
    %495 = vmatpush2.bf16.msra.mxu0 0
    %496 = vmatprep.subr.bf16.mxu0 0
    %497 = vmatpush2.bf16.msra.mxu0 0
    %498 = vmatprep.subr.bf16.mxu0 0
    %499 = vmatpush2.bf16.msra.mxu0 0
    %500 = vmatprep.subr.bf16.mxu0 0
    %501 = vmatpush2.bf16.msra.mxu0 0
    %502 = vmatprep.subr.bf16.mxu0 0
    %503 = vmatpush2.bf16.msra.mxu0 0
    %504 = vmatprep.subr.bf16.mxu0 0
    %505 = vmatpush2.bf16.msra.mxu0 0
    %506 = vmatprep.subr.bf16.mxu0 0
    %507 = vmatpush2.bf16.msra.mxu0 0
    %508 = vmatprep.mubr.bf16.mxu0 0
    %509 = vmatmul.mubr.bf16.gmra.mxu0 %v296
    %v510 = vpop.f32.mrf.mxu0
    %v511 = vadd.f32 0.0, %v510
    %v512 = vpop.f32.mrf.mxu0
    %v513 = vadd.f32 0.0, %v512
    %v514 = vpop.f32.mrf.mxu0
    %v515 = vadd.f32 0.0, %v514
    %v516 = vpop.f32.mrf.mxu0
    %v517 = vadd.f32 0.0, %v516
    %518 = vdwg.mxu0
    %519 = vmatprep.subr.bf16.mxu0 0
    %520 = vmatpush1.bf16.msra.mxu0 0
    %521 = vmatprep.subr.bf16.mxu0 0
    %522 = vmatpush1.bf16.msra.mxu0 0
    %523 = vmatprep.subr.bf16.mxu0 0
    %524 = vmatpush1.bf16.msra.mxu0 0
    %525 = vmatprep.subr.bf16.mxu0 0
    %526 = vmatpush1.bf16.msra.mxu0 0
    %527 = vmatprep.subr.bf16.mxu0 0
    %528 = vmatpush1.bf16.msra.mxu0 0
    %529 = vmatprep.subr.bf16.mxu0 %v327
    %530 = vmatpush1.bf16.msra.mxu0 %v324
    %531 = vmatprep.subr.bf16.mxu0 %v239
    %532 = vmatpush1.bf16.msra.mxu0 %v238
    %533 = vmatprep.subr.bf16.mxu0 %v223
    %534 = vmatpush1.bf16.msra.mxu0 %v222
    %535 = vmatprep.subr.bf16.mxu0 0
    %536 = vmatpush2.bf16.msra.mxu0 0
    %537 = vmatprep.subr.bf16.mxu0 0
    %538 = vmatpush2.bf16.msra.mxu0 0
    %539 = vmatprep.subr.bf16.mxu0 0
    %540 = vmatpush2.bf16.msra.mxu0 0
    %541 = vmatprep.subr.bf16.mxu0 0
    %542 = vmatpush2.bf16.msra.mxu0 0
    %543 = vmatprep.subr.bf16.mxu0 0
    %544 = vmatpush2.bf16.msra.mxu0 0
    %545 = vmatprep.subr.bf16.mxu0 0
    %546 = vmatpush2.bf16.msra.mxu0 0
    %547 = vmatprep.subr.bf16.mxu0 0
    %548 = vmatpush2.bf16.msra.mxu0 0
    %549 = vmatprep.subr.bf16.mxu0 0
    %550 = vmatpush2.bf16.msra.mxu0 0
    %551 = vmatprep.mubr.bf16.mxu0 0
    %552 = vmatmul.mubr.bf16.gmra.mxu0 %v296
    %v553 = vpop.f32.mrf.mxu0
    %v554 = vadd.f32 0.0, %v553
    %v555 = vpop.f32.mrf.mxu0
    %v556 = vadd.f32 0.0, %v555
    %v557 = vpop.f32.mrf.mxu0
    %v558 = vadd.f32 0.0, %v557
    %v559 = vpop.f32.mrf.mxu0
    %v560 = vadd.f32 0.0, %v559
    %561 = vdwg.mxu0
    %562 = vmatprep.subr.bf16.mxu0 0
    %563 = vmatpush1.bf16.msra.mxu0 0
    %564 = vmatprep.subr.bf16.mxu0 0
    %565 = vmatpush1.bf16.msra.mxu0 0
    %566 = vmatprep.subr.bf16.mxu0 0
    %567 = vmatpush1.bf16.msra.mxu0 0
    %568 = vmatprep.subr.bf16.mxu0 0
    %569 = vmatpush1.bf16.msra.mxu0 0
    %570 = vmatprep.subr.bf16.mxu0 0
    %571 = vmatpush1.bf16.msra.mxu0 0
    %572 = vmatprep.subr.bf16.mxu0 %v333
    %573 = vmatpush1.bf16.msra.mxu0 %v330
    %574 = vmatprep.subr.bf16.mxu0 %v241
    %575 = vmatpush1.bf16.msra.mxu0 %v240
    %576 = vmatprep.subr.bf16.mxu0 %v225
    %577 = vmatpush1.bf16.msra.mxu0 %v224
    %578 = vmatprep.subr.bf16.mxu0 0
    %579 = vmatpush2.bf16.msra.mxu0 0
    %580 = vmatprep.subr.bf16.mxu0 0
    %581 = vmatpush2.bf16.msra.mxu0 0
    %582 = vmatprep.subr.bf16.mxu0 0
    %583 = vmatpush2.bf16.msra.mxu0 0
    %584 = vmatprep.subr.bf16.mxu0 0
    %585 = vmatpush2.bf16.msra.mxu0 0
    %586 = vmatprep.subr.bf16.mxu0 0
    %587 = vmatpush2.bf16.msra.mxu0 0
    %588 = vmatprep.subr.bf16.mxu0 0
    %589 = vmatpush2.bf16.msra.mxu0 0
    %590 = vmatprep.subr.bf16.mxu0 0
    %591 = vmatpush2.bf16.msra.mxu0 0
    %592 = vmatprep.subr.bf16.mxu0 0
    %593 = vmatpush2.bf16.msra.mxu0 0
    %594 = vmatprep.mubr.bf16.mxu0 0
    %595 = vmatmul.mubr.bf16.gmra.mxu0 %v296
    %v596 = vpop.f32.mrf.mxu0
    %v597 = vadd.f32 0.0, %v596
    %v598 = vpop.f32.mrf.mxu0
    %v599 = vadd.f32 0.0, %v598
    %v600 = vpop.f32.mrf.mxu0
    %v601 = vadd.f32 0.0, %v600
    %v602 = vpop.f32.mrf.mxu0
    %v603 = vadd.f32 0.0, %v602
    %604 = vdwg.mxu0
    %605 = vmatprep.subr.bf16.mxu0 0
    %606 = vmatpush1.bf16.msra.mxu0 0
    %607 = vmatprep.subr.bf16.mxu0 0
    %608 = vmatpush1.bf16.msra.mxu0 0
    %609 = vmatprep.subr.bf16.mxu0 0
    %610 = vmatpush1.bf16.msra.mxu0 0
    %611 = vmatprep.subr.bf16.mxu0 0
    %612 = vmatpush1.bf16.msra.mxu0 0
    %613 = vmatprep.subr.bf16.mxu0 0
    %614 = vmatpush1.bf16.msra.mxu0 0
    %615 = vmatprep.subr.bf16.mxu0 %v339
    %616 = vmatpush1.bf16.msra.mxu0 %v336
    %617 = vmatprep.subr.bf16.mxu0 %v243
    %618 = vmatpush1.bf16.msra.mxu0 %v242
    %619 = vmatprep.subr.bf16.mxu0 %v227
    %620 = vmatpush1.bf16.msra.mxu0 %v226
    %621 = vmatprep.subr.bf16.mxu0 0
    %622 = vmatpush2.bf16.msra.mxu0 0
    %623 = vmatprep.subr.bf16.mxu0 0
    %624 = vmatpush2.bf16.msra.mxu0 0
    %625 = vmatprep.subr.bf16.mxu0 0
    %626 = vmatpush2.bf16.msra.mxu0 0
    %627 = vmatprep.subr.bf16.mxu0 0
    %628 = vmatpush2.bf16.msra.mxu0 0
    %629 = vmatprep.subr.bf16.mxu0 0
    %630 = vmatpush2.bf16.msra.mxu0 0
    %631 = vmatprep.subr.bf16.mxu0 0
    %632 = vmatpush2.bf16.msra.mxu0 0
    %633 = vmatprep.subr.bf16.mxu0 0
    %634 = vmatpush2.bf16.msra.mxu0 0
    %635 = vmatprep.subr.bf16.mxu0 0
    %636 = vmatpush2.bf16.msra.mxu0 0
    %637 = vmatprep.mubr.bf16.mxu0 0
    %638 = vmatmul.mubr.bf16.gmra.mxu0 %v296
    %v639 = vpop.f32.mrf.mxu0
    %v640 = vadd.f32 0.0, %v639
    %v641 = vpop.f32.mrf.mxu0
    %v642 = vadd.f32 0.0, %v641
    %v643 = vpop.f32.mrf.mxu0
    %v644 = vadd.f32 0.0, %v643
    %v645 = vpop.f32.mrf.mxu0
    %v646 = vadd.f32 0.0, %v645
    %647 = vdwg.mxu0
    %648 = vmatprep.subr.bf16.mxu0 0
    %649 = vmatpush1.bf16.msra.mxu0 0
    %650 = vmatprep.subr.bf16.mxu0 0
    %651 = vmatpush1.bf16.msra.mxu0 0
    %652 = vmatprep.subr.bf16.mxu0 0
    %653 = vmatpush1.bf16.msra.mxu0 0
    %654 = vmatprep.subr.bf16.mxu0 0
    %655 = vmatpush1.bf16.msra.mxu0 0
    %656 = vmatprep.subr.bf16.mxu0 0
    %657 = vmatpush1.bf16.msra.mxu0 0
    %658 = vmatprep.subr.bf16.mxu0 %v345
    %659 = vmatpush1.bf16.msra.mxu0 %v342
    %660 = vmatprep.subr.bf16.mxu0 %v245
    %661 = vmatpush1.bf16.msra.mxu0 %v244
    %662 = vmatprep.subr.bf16.mxu0 %v229
    %663 = vmatpush1.bf16.msra.mxu0 %v228
    %664 = vmatprep.subr.bf16.mxu0 0
    %665 = vmatpush2.bf16.msra.mxu0 0
    %666 = vmatprep.subr.bf16.mxu0 0
    %667 = vmatpush2.bf16.msra.mxu0 0
    %668 = vmatprep.subr.bf16.mxu0 0
    %669 = vmatpush2.bf16.msra.mxu0 0
    %670 = vmatprep.subr.bf16.mxu0 0
    %671 = vmatpush2.bf16.msra.mxu0 0
    %672 = vmatprep.subr.bf16.mxu0 0
    %673 = vmatpush2.bf16.msra.mxu0 0
    %674 = vmatprep.subr.bf16.mxu0 0
    %675 = vmatpush2.bf16.msra.mxu0 0
    %676 = vmatprep.subr.bf16.mxu0 0
    %677 = vmatpush2.bf16.msra.mxu0 0
    %678 = vmatprep.subr.bf16.mxu0 0
    %679 = vmatpush2.bf16.msra.mxu0 0
    %680 = vmatprep.mubr.bf16.mxu0 0
    %681 = vmatmul.mubr.bf16.gmra.mxu0 %v296
    %v682 = vpop.f32.mrf.mxu0
    %v683 = vadd.f32 0.0, %v682
    %v684 = vpop.f32.mrf.mxu0
    %v685 = vadd.f32 0.0, %v684
    %v686 = vpop.f32.mrf.mxu0
    %v687 = vadd.f32 0.0, %v686
    %v688 = vpop.f32.mrf.mxu0
    %v689 = vadd.f32 0.0, %v688
    %690 = vdwg.mxu0
    %v691 = vmax.f32 %v382, 0.0
    %v692 = vmax.f32 %v384, 0.0
    %v693 = vmax.f32 %v425, 0.0
    %v694 = vmax.f32 %v427, 0.0
    %v695 = vmax.f32 %v468, 0.0
    %v696 = vmax.f32 %v470, 0.0
    %v697 = vmax.f32 %v511, 0.0
    %v698 = vmax.f32 %v513, 0.0
    %v699 = vmax.f32 %v554, 0.0
    %v700 = vmax.f32 %v556, 0.0
    %v701 = vmax.f32 %v597, 0.0
    %v702 = vmax.f32 %v599, 0.0
    %v703 = vmax.f32 %v640, 0.0
    %v704 = vmax.f32 %v642, 0.0
    %v705 = vmax.f32 %v683, 0.0
    %v706 = vmax.f32 %v685, 0.0
    %v707 = vmax.f32 %v386, 0.0
    %v708 = vmax.f32 %v388, 0.0
    %v709 = vmax.f32 %v429, 0.0
    %v710 = vmax.f32 %v431, 0.0
    %v711 = vmax.f32 %v472, 0.0
    %v712 = vmax.f32 %v474, 0.0
    %v713 = vmax.f32 %v515, 0.0
    %v714 = vmax.f32 %v517, 0.0
    %v715 = vmax.f32 %v558, 0.0
    %v716 = vmax.f32 %v560, 0.0
    %v717 = vmax.f32 %v601, 0.0
    %v718 = vmax.f32 %v603, 0.0
    %v719 = vmax.f32 %v644, 0.0
    %v720 = vmax.f32 %v646, 0.0
    %v721 = vmax.f32 %v687, 0.0
    %v722 = vmax.f32 %v689, 0.0
    %v723 = vpack.c.bf16 %v707, %v691
    %v724 = vpack.c.bf16 %v708, %v692
    %v725 = vpack.c.bf16 %v709, %v693
    %v726 = vpack.c.bf16 %v710, %v694
    %v727 = vpack.c.bf16 %v711, %v695
    %v728 = vpack.c.bf16 %v712, %v696
    %v729 = vpack.c.bf16 %v713, %v697
    %v730 = vpack.c.bf16 %v714, %v698
    %v731 = vpack.c.bf16 %v715, %v699
    %v732 = vpack.c.bf16 %v716, %v700
    %v733 = vpack.c.bf16 %v717, %v701
    %v734 = vpack.c.bf16 %v718, %v702
    %v735 = vpack.c.bf16 %v719, %v703
    %v736 = vpack.c.bf16 %v720, %v704
    %v737 = vpack.c.bf16 %v721, %v705
    %v738 = vpack.c.bf16 %v722, %v706
    %v739 = vld [vmem:[#allocation5] sm:$0xf]
    %v740 = vld [vmem:[#allocation5 + $0x4] sm:$0xf]
    %v741 = vld [vmem:[#allocation5 + $0x8] sm:$0xf]
    %v742 = vld [vmem:[#allocation5 + $0xc] sm:$0xf]
    %v743 = vld [vmem:[#allocation5 + $0x10] sm:$0xf]
    %v744 = vld [vmem:[#allocation5 + $0x14] sm:$0xf]
    %v745 = vld [vmem:[#allocation5 + $0x18] sm:$0xf]
    %v746 = vld [vmem:[#allocation5 + $0x1c] sm:$0xf]
    %v747 = vld [vmem:[#allocation5 + $0x20] sm:$0xf]
    %v748 = vld [vmem:[#allocation5 + $0x24] sm:$0xf]
    %v749 = vld [vmem:[#allocation5 + $0x28] sm:$0xf]
    %v750 = vld [vmem:[#allocation5 + $0x2c] sm:$0xf]
    %v751 = vld [vmem:[#allocation5 + $0x30] sm:$0xf]
    %v752 = vld [vmem:[#allocation5 + $0x34] sm:$0xf]
    %v753 = vld [vmem:[#allocation5 + $0x38] sm:$0xf]
    %v754 = vld [vmem:[#allocation5 + $0x3c] sm:$0xf]
    %v755 = vld [vmem:[#allocation5 + $0x40] sm:$0xf]
    %v756 = vld [vmem:[#allocation5 + $0x44] sm:$0xf]
    %v757 = vld [vmem:[#allocation5 + $0x48] sm:$0xf]
    %v758 = vld [vmem:[#allocation5 + $0x4c] sm:$0xf]
    %v759 = vld [vmem:[#allocation5 + $0x50] sm:$0xf]
    %v760 = vld [vmem:[#allocation5 + $0x54] sm:$0xf]
    %v761 = vld [vmem:[#allocation5 + $0x58] sm:$0xf]
    %v762 = vld [vmem:[#allocation5 + $0x5c] sm:$0xf]
    %v763 = vld [vmem:[#allocation5 + $0x60] sm:$0xf]
    %v764 = vld [vmem:[#allocation5 + $0x64] sm:$0xf]
    %v765 = vld [vmem:[#allocation5 + $0x68] sm:$0xf]
    %v766 = vld [vmem:[#allocation5 + $0x6c] sm:$0xf]
    %v767 = vld [vmem:[#allocation5 + $0x70] sm:$0xf]
    %v768 = vld [vmem:[#allocation5 + $0x74] sm:$0xf]
    %v769 = vld [vmem:[#allocation5 + $0x78] sm:$0xf]
    %v770 = vld [vmem:[#allocation5 + $0x7c] sm:$0xf]
    %v771 = vld [vmem:[#allocation5 + $0x80] sm:$0xf]
    %v772 = vld [vmem:[#allocation5 + $0x84] sm:$0xf]
    %v773 = vld [vmem:[#allocation5 + $0x88] sm:$0xf]
    %v774 = vld [vmem:[#allocation5 + $0x8c] sm:$0xf]
    %v775 = vld [vmem:[#allocation5 + $0x90] sm:$0xf]
    %v776 = vld [vmem:[#allocation5 + $0x94] sm:$0xf]
    %v777 = vld [vmem:[#allocation5 + $0x98] sm:$0xf]
    %v778 = vld [vmem:[#allocation5 + $0x9c] sm:$0xf]
    %v779 = vld [vmem:[#allocation5 + $0xa0] sm:$0xf]
    %v780 = vld [vmem:[#allocation5 + $0xa4] sm:$0xf]
    %v781 = vld [vmem:[#allocation5 + $0xa8] sm:$0xf]
    %v782 = vld [vmem:[#allocation5 + $0xac] sm:$0xf]
    %v783 = vld [vmem:[#allocation5 + $0xb0] sm:$0xf]
    %v784 = vld [vmem:[#allocation5 + $0xb4] sm:$0xf]
    %v785 = vld [vmem:[#allocation5 + $0xb8] sm:$0xf]
    %v786 = vld [vmem:[#allocation5 + $0xbc] sm:$0xf]
    %v787 = vld [vmem:[#allocation5 + $0xc0] sm:$0xf]
    %v788 = vld [vmem:[#allocation5 + $0xc4] sm:$0xf]
    %v789 = vld [vmem:[#allocation5 + $0xc8] sm:$0xf]
    %v790 = vld [vmem:[#allocation5 + $0xcc] sm:$0xf]
    %v791 = vld [vmem:[#allocation5 + $0xd0] sm:$0xf]
    %v792 = vld [vmem:[#allocation5 + $0xd4] sm:$0xf]
    %v793 = vld [vmem:[#allocation5 + $0xd8] sm:$0xf]
    %v794 = vld [vmem:[#allocation5 + $0xdc] sm:$0xf]
    %v795 = vld [vmem:[#allocation5 + $0xe0] sm:$0xf]
    %v796 = vld [vmem:[#allocation5 + $0xe4] sm:$0xf]
    %v797 = vld [vmem:[#allocation5 + $0xe8] sm:$0xf]
    %v798 = vld [vmem:[#allocation5 + $0xec] sm:$0xf]
    %v799 = vld [vmem:[#allocation5 + $0xf0] sm:$0xf]
    %v800 = vld [vmem:[#allocation5 + $0xf4] sm:$0xf]
    %v801 = vld [vmem:[#allocation5 + $0xf8] sm:$0xf]
    %v802 = vld [vmem:[#allocation5 + $0xfc] sm:$0xf]
    %v803 = vld [vmem:[#allocation5 + $0x100] sm:$0xf]
    %v804 = vld [vmem:[#allocation5 + $0x104] sm:$0xf]
    %v805 = vld [vmem:[#allocation5 + $0x108] sm:$0xf]
    %v806 = vld [vmem:[#allocation5 + $0x10c] sm:$0xf]
    %v807 = vld [vmem:[#allocation5 + $0x110] sm:$0xf]
    %v808 = vld [vmem:[#allocation5 + $0x114] sm:$0xf]
    %v809 = vld [vmem:[#allocation5 + $0x118] sm:$0xf]
    %v810 = vld [vmem:[#allocation5 + $0x11c] sm:$0xf]
    %v811 = vld [vmem:[#allocation5 + $0x120] sm:$0xf]
    %v812 = vld [vmem:[#allocation5 + $0x124] sm:$0xf]
    %v813 = vld [vmem:[#allocation5 + $0x128] sm:$0xf]
    %v814 = vld [vmem:[#allocation5 + $0x12c] sm:$0xf]
    %v815 = vld [vmem:[#allocation5 + $0x130] sm:$0xf]
    %v816 = vld [vmem:[#allocation5 + $0x134] sm:$0xf]
    %v817 = vld [vmem:[#allocation5 + $0x138] sm:$0xf]
    %v818 = vld [vmem:[#allocation5 + $0x13c] sm:$0xf]
    %v819 = vld [vmem:[#allocation5 + $0x140] sm:$0xf]
    %v820 = vld [vmem:[#allocation5 + $0x144] sm:$0xf]
    %v821 = vld [vmem:[#allocation5 + $0x148] sm:$0xf]
    %v822 = vld [vmem:[#allocation5 + $0x14c] sm:$0xf]
    %v823 = vld [vmem:[#allocation5 + $0x150] sm:$0xf]
    %v824 = vld [vmem:[#allocation5 + $0x154] sm:$0xf]
    %v825 = vld [vmem:[#allocation5 + $0x158] sm:$0xf]
    %v826 = vld [vmem:[#allocation5 + $0x15c] sm:$0xf]
    %v827 = vld [vmem:[#allocation5 + $0x160] sm:$0xf]
    %v828 = vld [vmem:[#allocation5 + $0x164] sm:$0xf]
    %v829 = vld [vmem:[#allocation5 + $0x168] sm:$0xf]
    %v830 = vld [vmem:[#allocation5 + $0x16c] sm:$0xf]
    %v831 = vld [vmem:[#allocation5 + $0x170] sm:$0xf]
    %v832 = vld [vmem:[#allocation5 + $0x174] sm:$0xf]
    %v833 = vld [vmem:[#allocation5 + $0x178] sm:$0xf]
    %v834 = vld [vmem:[#allocation5 + $0x17c] sm:$0xf]
    %v835 = vld [vmem:[#allocation5 + $0x180] sm:$0xf]
    %v836 = vld [vmem:[#allocation5 + $0x184] sm:$0xf]
    %v837 = vld [vmem:[#allocation5 + $0x188] sm:$0xf]
    %v838 = vld [vmem:[#allocation5 + $0x18c] sm:$0xf]
    %v839 = vld [vmem:[#allocation5 + $0x190] sm:$0xf]
    %v840 = vld [vmem:[#allocation5 + $0x194] sm:$0xf]
    %v841 = vld [vmem:[#allocation5 + $0x198] sm:$0xf]
    %v842 = vld [vmem:[#allocation5 + $0x19c] sm:$0xf]
    %v843 = vld [vmem:[#allocation5 + $0x1a0] sm:$0xf]
    %v844 = vld [vmem:[#allocation5 + $0x1a4] sm:$0xf]
    %v845 = vld [vmem:[#allocation5 + $0x1a8] sm:$0xf]
    %v846 = vld [vmem:[#allocation5 + $0x1ac] sm:$0xf]
    %v847 = vld [vmem:[#allocation5 + $0x1b0] sm:$0xf]
    %v848 = vld [vmem:[#allocation5 + $0x1b4] sm:$0xf]
    %v849 = vld [vmem:[#allocation5 + $0x1b8] sm:$0xf]
    %v850 = vld [vmem:[#allocation5 + $0x1bc] sm:$0xf]
    %v851 = vld [vmem:[#allocation5 + $0x1c0] sm:$0xf]
    %v852 = vld [vmem:[#allocation5 + $0x1c4] sm:$0xf]
    %v853 = vld [vmem:[#allocation5 + $0x1c8] sm:$0xf]
    %v854 = vld [vmem:[#allocation5 + $0x1cc] sm:$0xf]
    %v855 = vld [vmem:[#allocation5 + $0x1d0] sm:$0xf]
    %v856 = vld [vmem:[#allocation5 + $0x1d4] sm:$0xf]
    %v857 = vld [vmem:[#allocation5 + $0x1d8] sm:$0xf]
    %v858 = vld [vmem:[#allocation5 + $0x1dc] sm:$0xf]
    %v859 = vld [vmem:[#allocation5 + $0x1e0] sm:$0xf]
    %v860 = vld [vmem:[#allocation5 + $0x1e4] sm:$0xf]
    %v861 = vld [vmem:[#allocation5 + $0x1e8] sm:$0xf]
    %v862 = vld [vmem:[#allocation5 + $0x1ec] sm:$0xf]
    %v863 = vld [vmem:[#allocation5 + $0x1f0] sm:$0xf]
    %v864 = vld [vmem:[#allocation5 + $0x1f4] sm:$0xf]
    %v865 = vld [vmem:[#allocation5 + $0x1f8] sm:$0xf]
    %v866 = vld [vmem:[#allocation5 + $0x1fc] sm:$0xf]
    %v867 = vld [vmem:[#allocation5 + $0x200] sm:$0xf]
    %v868 = vld [vmem:[#allocation5 + $0x204] sm:$0xf]
    %v869 = vld [vmem:[#allocation5 + $0x208] sm:$0xf]
    %v870 = vld [vmem:[#allocation5 + $0x20c] sm:$0xf]
    %v871 = vld [vmem:[#allocation5 + $0x210] sm:$0xf]
    %v872 = vld [vmem:[#allocation5 + $0x214] sm:$0xf]
    %v873 = vld [vmem:[#allocation5 + $0x218] sm:$0xf]
    %v874 = vld [vmem:[#allocation5 + $0x21c] sm:$0xf]
    %v875 = vld [vmem:[#allocation5 + $0x220] sm:$0xf]
    %v876 = vld [vmem:[#allocation5 + $0x224] sm:$0xf]
    %v877 = vld [vmem:[#allocation5 + $0x228] sm:$0xf]
    %v878 = vld [vmem:[#allocation5 + $0x22c] sm:$0xf]
    %v879 = vld [vmem:[#allocation5 + $0x230] sm:$0xf]
    %v880 = vld [vmem:[#allocation5 + $0x234] sm:$0xf]
    %v881 = vld [vmem:[#allocation5 + $0x238] sm:$0xf]
    %v882 = vld [vmem:[#allocation5 + $0x23c] sm:$0xf]
    %v883 = vld [vmem:[#allocation5 + $0x240] sm:$0xf]
    %v884 = vld [vmem:[#allocation5 + $0x244] sm:$0xf]
    %v885 = vld [vmem:[#allocation5 + $0x248] sm:$0xf]
    %v886 = vld [vmem:[#allocation5 + $0x24c] sm:$0xf]
    %v887 = vld [vmem:[#allocation5 + $0x250] sm:$0xf]
    %v888 = vld [vmem:[#allocation5 + $0x254] sm:$0xf]
    %v889 = vld [vmem:[#allocation5 + $0x258] sm:$0xf]
    %v890 = vld [vmem:[#allocation5 + $0x25c] sm:$0xf]
    %v891 = vld [vmem:[#allocation5 + $0x260] sm:$0xf]
    %v892 = vld [vmem:[#allocation5 + $0x264] sm:$0xf]
    %v893 = vld [vmem:[#allocation5 + $0x268] sm:$0xf]
    %v894 = vld [vmem:[#allocation5 + $0x26c] sm:$0xf]
    %v895 = vld [vmem:[#allocation5 + $0x270] sm:$0xf]
    %v896 = vld [vmem:[#allocation5 + $0x274] sm:$0xf]
    %v897 = vld [vmem:[#allocation5 + $0x278] sm:$0xf]
    %v898 = vld [vmem:[#allocation5 + $0x27c] sm:$0xf]
    %v899 = vld [vmem:[#allocation5 + $0x280] sm:$0xf]
    %v900 = vld [vmem:[#allocation5 + $0x284] sm:$0xf]
    %v901 = vld [vmem:[#allocation5 + $0x288] sm:$0xf]
    %v902 = vld [vmem:[#allocation5 + $0x28c] sm:$0xf]
    %v903 = vld [vmem:[#allocation5 + $0x290] sm:$0xf]
    %v904 = vld [vmem:[#allocation5 + $0x294] sm:$0xf]
    %v905 = vld [vmem:[#allocation5 + $0x298] sm:$0xf]
    %v906 = vld [vmem:[#allocation5 + $0x29c] sm:$0xf]
    %v907 = vld [vmem:[#allocation5 + $0x2a0] sm:$0xf]
    %v908 = vld [vmem:[#allocation5 + $0x2a4] sm:$0xf]
    %v909 = vld [vmem:[#allocation5 + $0x2a8] sm:$0xf]
    %v910 = vld [vmem:[#allocation5 + $0x2ac] sm:$0xf]
    %v911 = vld [vmem:[#allocation5 + $0x2b0] sm:$0xf]
    %v912 = vld [vmem:[#allocation5 + $0x2b4] sm:$0xf]
    %v913 = vld [vmem:[#allocation5 + $0x2b8] sm:$0xf]
    %v914 = vld [vmem:[#allocation5 + $0x2bc] sm:$0xf]
    %v915 = vld [vmem:[#allocation5 + $0x2c0] sm:$0xf]
    %v916 = vld [vmem:[#allocation5 + $0x2c4] sm:$0xf]
    %v917 = vld [vmem:[#allocation5 + $0x2c8] sm:$0xf]
    %v918 = vld [vmem:[#allocation5 + $0x2cc] sm:$0xf]
    %v919 = vld [vmem:[#allocation5 + $0x2d0] sm:$0xf]
    %v920 = vld [vmem:[#allocation5 + $0x2d4] sm:$0xf]
    %v921 = vld [vmem:[#allocation5 + $0x2d8] sm:$0xf]
    %v922 = vld [vmem:[#allocation5 + $0x2dc] sm:$0xf]
    %v923 = vld [vmem:[#allocation5 + $0x2e0] sm:$0xf]
    %v924 = vld [vmem:[#allocation5 + $0x2e4] sm:$0xf]
    %v925 = vld [vmem:[#allocation5 + $0x2e8] sm:$0xf]
    %v926 = vld [vmem:[#allocation5 + $0x2ec] sm:$0xf]
    %v927 = vld [vmem:[#allocation5 + $0x2f0] sm:$0xf]
    %v928 = vld [vmem:[#allocation5 + $0x2f4] sm:$0xf]
    %v929 = vld [vmem:[#allocation5 + $0x2f8] sm:$0xf]
    %v930 = vld [vmem:[#allocation5 + $0x2fc] sm:$0xf]
    %v931 = vld [vmem:[#allocation5 + $0x300] sm:$0xf]
    %v932 = vld [vmem:[#allocation5 + $0x304] sm:$0xf]
    %v933 = vld [vmem:[#allocation5 + $0x308] sm:$0xf]
    %v934 = vld [vmem:[#allocation5 + $0x30c] sm:$0xf]
    %v935 = vld [vmem:[#allocation5 + $0x310] sm:$0xf]
    %v936 = vld [vmem:[#allocation5 + $0x314] sm:$0xf]
    %v937 = vld [vmem:[#allocation5 + $0x318] sm:$0xf]
    %v938 = vld [vmem:[#allocation5 + $0x31c] sm:$0xf]
    %v939 = vld [vmem:[#allocation5 + $0x320] sm:$0xf]
    %v940 = vld [vmem:[#allocation5 + $0x324] sm:$0xf]
    %v941 = vld [vmem:[#allocation5 + $0x328] sm:$0xf]
    %v942 = vld [vmem:[#allocation5 + $0x32c] sm:$0xf]
    %v943 = vld [vmem:[#allocation5 + $0x330] sm:$0xf]
    %v944 = vld [vmem:[#allocation5 + $0x334] sm:$0xf]
    %v945 = vld [vmem:[#allocation5 + $0x338] sm:$0xf]
    %v946 = vld [vmem:[#allocation5 + $0x33c] sm:$0xf]
    %v947 = vld [vmem:[#allocation5 + $0x340] sm:$0xf]
    %v948 = vld [vmem:[#allocation5 + $0x344] sm:$0xf]
    %v949 = vld [vmem:[#allocation5 + $0x348] sm:$0xf]
    %v950 = vld [vmem:[#allocation5 + $0x34c] sm:$0xf]
    %v951 = vld [vmem:[#allocation5 + $0x350] sm:$0xf]
    %v952 = vld [vmem:[#allocation5 + $0x354] sm:$0xf]
    %v953 = vld [vmem:[#allocation5 + $0x358] sm:$0xf]
    %v954 = vld [vmem:[#allocation5 + $0x35c] sm:$0xf]
    %v955 = vld [vmem:[#allocation5 + $0x360] sm:$0xf]
    %v956 = vld [vmem:[#allocation5 + $0x364] sm:$0xf]
    %v957 = vld [vmem:[#allocation5 + $0x368] sm:$0xf]
    %v958 = vld [vmem:[#allocation5 + $0x36c] sm:$0xf]
    %v959 = vld [vmem:[#allocation5 + $0x370] sm:$0xf]
    %v960 = vld [vmem:[#allocation5 + $0x374] sm:$0xf]
    %v961 = vld [vmem:[#allocation5 + $0x378] sm:$0xf]
    %v962 = vld [vmem:[#allocation5 + $0x37c] sm:$0xf]
    %v963 = vld [vmem:[#allocation5 + $0x380] sm:$0xf]
    %v964 = vld [vmem:[#allocation5 + $0x384] sm:$0xf]
    %v965 = vld [vmem:[#allocation5 + $0x388] sm:$0xf]
    %v966 = vld [vmem:[#allocation5 + $0x38c] sm:$0xf]
    %v967 = vld [vmem:[#allocation5 + $0x390] sm:$0xf]
    %v968 = vld [vmem:[#allocation5 + $0x394] sm:$0xf]
    %v969 = vld [vmem:[#allocation5 + $0x398] sm:$0xf]
    %v970 = vld [vmem:[#allocation5 + $0x39c] sm:$0xf]
    %v971 = vld [vmem:[#allocation5 + $0x3a0] sm:$0xf]
    %v972 = vld [vmem:[#allocation5 + $0x3a4] sm:$0xf]
    %v973 = vld [vmem:[#allocation5 + $0x3a8] sm:$0xf]
    %v974 = vld [vmem:[#allocation5 + $0x3ac] sm:$0xf]
    %v975 = vld [vmem:[#allocation5 + $0x3b0] sm:$0xf]
    %v976 = vld [vmem:[#allocation5 + $0x3b4] sm:$0xf]
    %v977 = vld [vmem:[#allocation5 + $0x3b8] sm:$0xf]
    %v978 = vld [vmem:[#allocation5 + $0x3bc] sm:$0xf]
    %v979 = vld [vmem:[#allocation5 + $0x3c0] sm:$0xf]
    %v980 = vld [vmem:[#allocation5 + $0x3c4] sm:$0xf]
    %v981 = vld [vmem:[#allocation5 + $0x3c8] sm:$0xf]
    %v982 = vld [vmem:[#allocation5 + $0x3cc] sm:$0xf]
    %v983 = vld [vmem:[#allocation5 + $0x3d0] sm:$0xf]
    %v984 = vld [vmem:[#allocation5 + $0x3d4] sm:$0xf]
    %v985 = vld [vmem:[#allocation5 + $0x3d8] sm:$0xf]
    %v986 = vld [vmem:[#allocation5 + $0x3dc] sm:$0xf]
    %v987 = vld [vmem:[#allocation5 + $0x3e0] sm:$0xf]
    %v988 = vld [vmem:[#allocation5 + $0x3e4] sm:$0xf]
    %v989 = vld [vmem:[#allocation5 + $0x3e8] sm:$0xf]
    %v990 = vld [vmem:[#allocation5 + $0x3ec] sm:$0xf]
    %v991 = vld [vmem:[#allocation5 + $0x3f0] sm:$0xf]
    %v992 = vld [vmem:[#allocation5 + $0x3f4] sm:$0xf]
    %v993 = vld [vmem:[#allocation5 + $0x3f8] sm:$0xf]
    %v994 = vld [vmem:[#allocation5 + $0x3fc] sm:$0xf]
    %v995 = vld [vmem:[%s3] sm:$0x1]
    %v997 = vlaneseq
    %v998 = vshrl.u32 %v997, 7
    %v999 = vsub.s32 0, %v998
    %v1000 = vrot.slane %v995, %v999
    %v1258 = vunpack.c.l.b16 %v739
    %v1259 = vunpack.c.l.b16 %v740
    %v1260 = vunpack.c.l.b16 %v741
    %v1261 = vunpack.c.l.b16 %v742
    %v1262 = vunpack.c.l.b16 %v743
    %v1263 = vunpack.c.l.b16 %v744
    %v1264 = vunpack.c.l.b16 %v745
    %v1265 = vunpack.c.l.b16 %v746
    %v1266 = vunpack.c.l.b16 %v747
    %v1267 = vunpack.c.l.b16 %v748
    %v1268 = vunpack.c.l.b16 %v749
    %v1269 = vunpack.c.l.b16 %v750
    %v1270 = vunpack.c.l.b16 %v751
    %v1271 = vunpack.c.l.b16 %v752
    %v1272 = vunpack.c.l.b16 %v753
    %v1273 = vunpack.c.l.b16 %v754
    %v1274 = vunpack.c.l.b16 %v755
    %v1275 = vunpack.c.l.b16 %v756
    %v1276 = vunpack.c.l.b16 %v757
    %v1277 = vunpack.c.l.b16 %v758
    %v1278 = vunpack.c.l.b16 %v759
    %v1279 = vunpack.c.l.b16 %v760
    %v1280 = vunpack.c.l.b16 %v761
    %v1281 = vunpack.c.l.b16 %v762
    %v1282 = vunpack.c.l.b16 %v763
    %v1283 = vunpack.c.l.b16 %v764
    %v1284 = vunpack.c.l.b16 %v765
    %v1285 = vunpack.c.l.b16 %v766
    %v1286 = vunpack.c.l.b16 %v767
    %v1287 = vunpack.c.l.b16 %v768
    %v1288 = vunpack.c.l.b16 %v769
    %v1289 = vunpack.c.l.b16 %v770
    %v1290 = vunpack.c.l.b16 %v771
    %v1291 = vunpack.c.l.b16 %v772
    %v1292 = vunpack.c.l.b16 %v773
    %v1293 = vunpack.c.l.b16 %v774
    %v1294 = vunpack.c.l.b16 %v775
    %v1295 = vunpack.c.l.b16 %v776
    %v1296 = vunpack.c.l.b16 %v777
    %v1297 = vunpack.c.l.b16 %v778
    %v1298 = vunpack.c.l.b16 %v779
    %v1299 = vunpack.c.l.b16 %v780
    %v1300 = vunpack.c.l.b16 %v781
    %v1301 = vunpack.c.l.b16 %v782
    %v1302 = vunpack.c.l.b16 %v783
    %v1303 = vunpack.c.l.b16 %v784
    %v1304 = vunpack.c.l.b16 %v785
    %v1305 = vunpack.c.l.b16 %v786
    %v1306 = vunpack.c.l.b16 %v787
    %v1307 = vunpack.c.l.b16 %v788
    %v1308 = vunpack.c.l.b16 %v789
    %v1309 = vunpack.c.l.b16 %v790
    %v1310 = vunpack.c.l.b16 %v791
    %v1311 = vunpack.c.l.b16 %v792
    %v1312 = vunpack.c.l.b16 %v793
    %v1313 = vunpack.c.l.b16 %v794
    %v1314 = vunpack.c.l.b16 %v795
    %v1315 = vunpack.c.l.b16 %v796
    %v1316 = vunpack.c.l.b16 %v797
    %v1317 = vunpack.c.l.b16 %v798
    %v1318 = vunpack.c.l.b16 %v799
    %v1319 = vunpack.c.l.b16 %v800
    %v1320 = vunpack.c.l.b16 %v801
    %v1321 = vunpack.c.l.b16 %v802
    %v1322 = vunpack.c.l.b16 %v803
    %v1323 = vunpack.c.l.b16 %v804
    %v1324 = vunpack.c.l.b16 %v805
    %v1325 = vunpack.c.l.b16 %v806
    %v1326 = vunpack.c.l.b16 %v807
    %v1327 = vunpack.c.l.b16 %v808
    %v1328 = vunpack.c.l.b16 %v809
    %v1329 = vunpack.c.l.b16 %v810
    %v1330 = vunpack.c.l.b16 %v811
    %v1331 = vunpack.c.l.b16 %v812
    %v1332 = vunpack.c.l.b16 %v813
    %v1333 = vunpack.c.l.b16 %v814
    %v1334 = vunpack.c.l.b16 %v815
    %v1335 = vunpack.c.l.b16 %v816
    %v1336 = vunpack.c.l.b16 %v817
    %v1337 = vunpack.c.l.b16 %v818
    %v1338 = vunpack.c.l.b16 %v819
    %v1339 = vunpack.c.l.b16 %v820
    %v1340 = vunpack.c.l.b16 %v821
    %v1341 = vunpack.c.l.b16 %v822
    %v1342 = vunpack.c.l.b16 %v823
    %v1343 = vunpack.c.l.b16 %v824
    %v1344 = vunpack.c.l.b16 %v825
    %v1345 = vunpack.c.l.b16 %v826
    %v1346 = vunpack.c.l.b16 %v827
    %v1347 = vunpack.c.l.b16 %v828
    %v1348 = vunpack.c.l.b16 %v829
    %v1349 = vunpack.c.l.b16 %v830
    %v1350 = vunpack.c.l.b16 %v831
    %v1351 = vunpack.c.l.b16 %v832
    %v1352 = vunpack.c.l.b16 %v833
    %v1353 = vunpack.c.l.b16 %v834
    %v1354 = vunpack.c.l.b16 %v835
    %v1355 = vunpack.c.l.b16 %v836
    %v1356 = vunpack.c.l.b16 %v837
    %v1357 = vunpack.c.l.b16 %v838
    %v1358 = vunpack.c.l.b16 %v839
    %v1359 = vunpack.c.l.b16 %v840
    %v1360 = vunpack.c.l.b16 %v841
    %v1361 = vunpack.c.l.b16 %v842
    %v1362 = vunpack.c.l.b16 %v843
    %v1363 = vunpack.c.l.b16 %v844
    %v1364 = vunpack.c.l.b16 %v845
    %v1365 = vunpack.c.l.b16 %v846
    %v1366 = vunpack.c.l.b16 %v847
    %v1367 = vunpack.c.l.b16 %v848
    %v1368 = vunpack.c.l.b16 %v849
    %v1369 = vunpack.c.l.b16 %v850
    %v1370 = vunpack.c.l.b16 %v851
    %v1371 = vunpack.c.l.b16 %v852
    %v1372 = vunpack.c.l.b16 %v853
    %v1373 = vunpack.c.l.b16 %v854
    %v1374 = vunpack.c.l.b16 %v855
    %v1375 = vunpack.c.l.b16 %v856
    %v1376 = vunpack.c.l.b16 %v857
    %v1377 = vunpack.c.l.b16 %v858
    %v1378 = vunpack.c.l.b16 %v859
    %v1379 = vunpack.c.l.b16 %v860
    %v1380 = vunpack.c.l.b16 %v861
    %v1381 = vunpack.c.l.b16 %v862
    %v1382 = vunpack.c.l.b16 %v863
    %v1383 = vunpack.c.l.b16 %v864
    %v1384 = vunpack.c.l.b16 %v865
    %v1385 = vunpack.c.l.b16 %v866
    %v1386 = vunpack.c.l.b16 %v867
    %v1387 = vunpack.c.l.b16 %v868
    %v1388 = vunpack.c.l.b16 %v869
    %v1389 = vunpack.c.l.b16 %v870
    %v1390 = vunpack.c.l.b16 %v871
    %v1391 = vunpack.c.l.b16 %v872
    %v1392 = vunpack.c.l.b16 %v873
    %v1393 = vunpack.c.l.b16 %v874
    %v1394 = vunpack.c.l.b16 %v875
    %v1395 = vunpack.c.l.b16 %v876
    %v1396 = vunpack.c.l.b16 %v877
    %v1397 = vunpack.c.l.b16 %v878
    %v1398 = vunpack.c.l.b16 %v879
    %v1399 = vunpack.c.l.b16 %v880
    %v1400 = vunpack.c.l.b16 %v881
    %v1401 = vunpack.c.l.b16 %v882
    %v1402 = vunpack.c.l.b16 %v883
    %v1403 = vunpack.c.l.b16 %v884
    %v1404 = vunpack.c.l.b16 %v885
    %v1405 = vunpack.c.l.b16 %v886
    %v1406 = vunpack.c.l.b16 %v887
    %v1407 = vunpack.c.l.b16 %v888
    %v1408 = vunpack.c.l.b16 %v889
    %v1409 = vunpack.c.l.b16 %v890
    %v1410 = vunpack.c.l.b16 %v891
    %v1411 = vunpack.c.l.b16 %v892
    %v1412 = vunpack.c.l.b16 %v893
    %v1413 = vunpack.c.l.b16 %v894
    %v1414 = vunpack.c.l.b16 %v895
    %v1415 = vunpack.c.l.b16 %v896
    %v1416 = vunpack.c.l.b16 %v897
    %v1417 = vunpack.c.l.b16 %v898
    %v1418 = vunpack.c.l.b16 %v899
    %v1419 = vunpack.c.l.b16 %v900
    %v1420 = vunpack.c.l.b16 %v901
    %v1421 = vunpack.c.l.b16 %v902
    %v1422 = vunpack.c.l.b16 %v903
    %v1423 = vunpack.c.l.b16 %v904
    %v1424 = vunpack.c.l.b16 %v905
    %v1425 = vunpack.c.l.b16 %v906
    %v1426 = vunpack.c.l.b16 %v907
    %v1427 = vunpack.c.l.b16 %v908
    %v1428 = vunpack.c.l.b16 %v909
    %v1429 = vunpack.c.l.b16 %v910
    %v1430 = vunpack.c.l.b16 %v911
    %v1431 = vunpack.c.l.b16 %v912
    %v1432 = vunpack.c.l.b16 %v913
    %v1433 = vunpack.c.l.b16 %v914
    %v1434 = vunpack.c.l.b16 %v915
    %v1435 = vunpack.c.l.b16 %v916
    %v1436 = vunpack.c.l.b16 %v917
    %v1437 = vunpack.c.l.b16 %v918
    %v1438 = vunpack.c.l.b16 %v919
    %v1439 = vunpack.c.l.b16 %v920
    %v1440 = vunpack.c.l.b16 %v921
    %v1441 = vunpack.c.l.b16 %v922
    %v1442 = vunpack.c.l.b16 %v923
    %v1443 = vunpack.c.l.b16 %v924
    %v1444 = vunpack.c.l.b16 %v925
    %v1445 = vunpack.c.l.b16 %v926
    %v1446 = vunpack.c.l.b16 %v927
    %v1447 = vunpack.c.l.b16 %v928
    %v1448 = vunpack.c.l.b16 %v929
    %v1449 = vunpack.c.l.b16 %v930
    %v1450 = vunpack.c.l.b16 %v931
    %v1451 = vunpack.c.l.b16 %v932
    %v1452 = vunpack.c.l.b16 %v933
    %v1453 = vunpack.c.l.b16 %v934
    %v1454 = vunpack.c.l.b16 %v935
    %v1455 = vunpack.c.l.b16 %v936
    %v1456 = vunpack.c.l.b16 %v937
    %v1457 = vunpack.c.l.b16 %v938
    %v1458 = vunpack.c.l.b16 %v939
    %v1459 = vunpack.c.l.b16 %v940
    %v1460 = vunpack.c.l.b16 %v941
    %v1461 = vunpack.c.l.b16 %v942
    %v1462 = vunpack.c.l.b16 %v943
    %v1463 = vunpack.c.l.b16 %v944
    %v1464 = vunpack.c.l.b16 %v945
    %v1465 = vunpack.c.l.b16 %v946
    %v1466 = vunpack.c.l.b16 %v947
    %v1467 = vunpack.c.l.b16 %v948
    %v1468 = vunpack.c.l.b16 %v949
    %v1469 = vunpack.c.l.b16 %v950
    %v1470 = vunpack.c.l.b16 %v951
    %v1471 = vunpack.c.l.b16 %v952
    %v1472 = vunpack.c.l.b16 %v953
    %v1473 = vunpack.c.l.b16 %v954
    %v1474 = vunpack.c.l.b16 %v955
    %v1475 = vunpack.c.l.b16 %v956
    %v1476 = vunpack.c.l.b16 %v957
    %v1477 = vunpack.c.l.b16 %v958
    %v1478 = vunpack.c.l.b16 %v959
    %v1479 = vunpack.c.l.b16 %v960
    %v1480 = vunpack.c.l.b16 %v961
    %v1481 = vunpack.c.l.b16 %v962
    %v1482 = vunpack.c.l.b16 %v963
    %v1483 = vunpack.c.l.b16 %v964
    %v1484 = vunpack.c.l.b16 %v965
    %v1485 = vunpack.c.l.b16 %v966
    %v1486 = vunpack.c.l.b16 %v967
    %v1487 = vunpack.c.l.b16 %v968
    %v1488 = vunpack.c.l.b16 %v969
    %v1489 = vunpack.c.l.b16 %v970
    %v1490 = vunpack.c.l.b16 %v971
    %v1491 = vunpack.c.l.b16 %v972
    %v1492 = vunpack.c.l.b16 %v973
    %v1493 = vunpack.c.l.b16 %v974
    %v1494 = vunpack.c.l.b16 %v975
    %v1495 = vunpack.c.l.b16 %v976
    %v1496 = vunpack.c.l.b16 %v977
    %v1497 = vunpack.c.l.b16 %v978
    %v1498 = vunpack.c.l.b16 %v979
    %v1499 = vunpack.c.l.b16 %v980
    %v1500 = vunpack.c.l.b16 %v981
    %v1501 = vunpack.c.l.b16 %v982
    %v1502 = vunpack.c.l.b16 %v983
    %v1503 = vunpack.c.l.b16 %v984
    %v1504 = vunpack.c.l.b16 %v985
    %v1505 = vunpack.c.l.b16 %v986
    %v1506 = vunpack.c.l.b16 %v987
    %v1507 = vunpack.c.l.b16 %v988
    %v1508 = vunpack.c.l.b16 %v989
    %v1509 = vunpack.c.l.b16 %v990
    %v1510 = vunpack.c.l.b16 %v991
    %v1511 = vunpack.c.l.b16 %v992
    %v1512 = vunpack.c.l.b16 %v993
    %v1513 = vunpack.c.l.b16 %v994
    %v1514 = vpack.c.b16 %v1259, %v1258
    %v1515 = vpack.c.b16 %v1261, %v1260
    %v1516 = vpack.c.b16 %v1263, %v1262
    %v1517 = vpack.c.b16 %v1265, %v1264
    %v1518 = vpack.c.b16 %v1267, %v1266
    %v1519 = vpack.c.b16 %v1269, %v1268
    %v1520 = vpack.c.b16 %v1271, %v1270
    %v1521 = vpack.c.b16 %v1273, %v1272
    %v1522 = vpack.c.b16 %v1275, %v1274
    %v1523 = vpack.c.b16 %v1277, %v1276
    %v1524 = vpack.c.b16 %v1279, %v1278
    %v1525 = vpack.c.b16 %v1281, %v1280
    %v1526 = vpack.c.b16 %v1283, %v1282
    %v1527 = vpack.c.b16 %v1285, %v1284
    %v1528 = vpack.c.b16 %v1287, %v1286
    %v1529 = vpack.c.b16 %v1289, %v1288
    %v1530 = vpack.c.b16 %v1291, %v1290
    %v1531 = vpack.c.b16 %v1293, %v1292
    %v1532 = vpack.c.b16 %v1295, %v1294
    %v1533 = vpack.c.b16 %v1297, %v1296
    %v1534 = vpack.c.b16 %v1299, %v1298
    %v1535 = vpack.c.b16 %v1301, %v1300
    %v1536 = vpack.c.b16 %v1303, %v1302
    %v1537 = vpack.c.b16 %v1305, %v1304
    %v1538 = vpack.c.b16 %v1307, %v1306
    %v1539 = vpack.c.b16 %v1309, %v1308
    %v1540 = vpack.c.b16 %v1311, %v1310
    %v1541 = vpack.c.b16 %v1313, %v1312
    %v1542 = vpack.c.b16 %v1315, %v1314
    %v1543 = vpack.c.b16 %v1317, %v1316
    %v1544 = vpack.c.b16 %v1319, %v1318
    %v1545 = vpack.c.b16 %v1321, %v1320
    %v1546 = vpack.c.b16 %v1323, %v1322
    %v1547 = vpack.c.b16 %v1325, %v1324
    %v1548 = vpack.c.b16 %v1327, %v1326
    %v1549 = vpack.c.b16 %v1329, %v1328
    %v1550 = vpack.c.b16 %v1331, %v1330
    %v1551 = vpack.c.b16 %v1333, %v1332
    %v1552 = vpack.c.b16 %v1335, %v1334
    %v1553 = vpack.c.b16 %v1337, %v1336
    %v1554 = vpack.c.b16 %v1339, %v1338
    %v1555 = vpack.c.b16 %v1341, %v1340
    %v1556 = vpack.c.b16 %v1343, %v1342
    %v1557 = vpack.c.b16 %v1345, %v1344
    %v1558 = vpack.c.b16 %v1347, %v1346
    %v1559 = vpack.c.b16 %v1349, %v1348
    %v1560 = vpack.c.b16 %v1351, %v1350
    %v1561 = vpack.c.b16 %v1353, %v1352
    %v1562 = vpack.c.b16 %v1355, %v1354
    %v1563 = vpack.c.b16 %v1357, %v1356
    %v1564 = vpack.c.b16 %v1359, %v1358
    %v1565 = vpack.c.b16 %v1361, %v1360
    %v1566 = vpack.c.b16 %v1363, %v1362
    %v1567 = vpack.c.b16 %v1365, %v1364
    %v1568 = vpack.c.b16 %v1367, %v1366
    %v1569 = vpack.c.b16 %v1369, %v1368
    %v1570 = vpack.c.b16 %v1371, %v1370
    %v1571 = vpack.c.b16 %v1373, %v1372
    %v1572 = vpack.c.b16 %v1375, %v1374
    %v1573 = vpack.c.b16 %v1377, %v1376
    %v1574 = vpack.c.b16 %v1379, %v1378
    %v1575 = vpack.c.b16 %v1381, %v1380
    %v1576 = vpack.c.b16 %v1383, %v1382
    %v1577 = vpack.c.b16 %v1385, %v1384
    %v1578 = vpack.c.b16 %v1387, %v1386
    %v1579 = vpack.c.b16 %v1389, %v1388
    %v1580 = vpack.c.b16 %v1391, %v1390
    %v1581 = vpack.c.b16 %v1393, %v1392
    %v1582 = vpack.c.b16 %v1395, %v1394
    %v1583 = vpack.c.b16 %v1397, %v1396
    %v1584 = vpack.c.b16 %v1399, %v1398
    %v1585 = vpack.c.b16 %v1401, %v1400
    %v1586 = vpack.c.b16 %v1403, %v1402
    %v1587 = vpack.c.b16 %v1405, %v1404
    %v1588 = vpack.c.b16 %v1407, %v1406
    %v1589 = vpack.c.b16 %v1409, %v1408
    %v1590 = vpack.c.b16 %v1411, %v1410
    %v1591 = vpack.c.b16 %v1413, %v1412
    %v1592 = vpack.c.b16 %v1415, %v1414
    %v1593 = vpack.c.b16 %v1417, %v1416
    %v1594 = vpack.c.b16 %v1419, %v1418
    %v1595 = vpack.c.b16 %v1421, %v1420
    %v1596 = vpack.c.b16 %v1423, %v1422
    %v1597 = vpack.c.b16 %v1425, %v1424
    %v1598 = vpack.c.b16 %v1427, %v1426
    %v1599 = vpack.c.b16 %v1429, %v1428
    %v1600 = vpack.c.b16 %v1431, %v1430
    %v1601 = vpack.c.b16 %v1433, %v1432
    %v1602 = vpack.c.b16 %v1435, %v1434
    %v1603 = vpack.c.b16 %v1437, %v1436
    %v1604 = vpack.c.b16 %v1439, %v1438
    %v1605 = vpack.c.b16 %v1441, %v1440
    %v1606 = vpack.c.b16 %v1443, %v1442
    %v1607 = vpack.c.b16 %v1445, %v1444
    %v1608 = vpack.c.b16 %v1447, %v1446
    %v1609 = vpack.c.b16 %v1449, %v1448
    %v1610 = vpack.c.b16 %v1451, %v1450
    %v1611 = vpack.c.b16 %v1453, %v1452
    %v1612 = vpack.c.b16 %v1455, %v1454
    %v1613 = vpack.c.b16 %v1457, %v1456
    %v1614 = vpack.c.b16 %v1459, %v1458
    %v1615 = vpack.c.b16 %v1461, %v1460
    %v1616 = vpack.c.b16 %v1463, %v1462
    %v1617 = vpack.c.b16 %v1465, %v1464
    %v1618 = vpack.c.b16 %v1467, %v1466
    %v1619 = vpack.c.b16 %v1469, %v1468
    %v1620 = vpack.c.b16 %v1471, %v1470
    %v1621 = vpack.c.b16 %v1473, %v1472
    %v1622 = vpack.c.b16 %v1475, %v1474
    %v1623 = vpack.c.b16 %v1477, %v1476
    %v1624 = vpack.c.b16 %v1479, %v1478
    %v1625 = vpack.c.b16 %v1481, %v1480
    %v1626 = vpack.c.b16 %v1483, %v1482
    %v1627 = vpack.c.b16 %v1485, %v1484
    %v1628 = vpack.c.b16 %v1487, %v1486
    %v1629 = vpack.c.b16 %v1489, %v1488
    %v1630 = vpack.c.b16 %v1491, %v1490
    %v1631 = vpack.c.b16 %v1493, %v1492
    %v1632 = vpack.c.b16 %v1495, %v1494
    %v1633 = vpack.c.b16 %v1497, %v1496
    %v1634 = vpack.c.b16 %v1499, %v1498
    %v1635 = vpack.c.b16 %v1501, %v1500
    %v1636 = vpack.c.b16 %v1503, %v1502
    %v1637 = vpack.c.b16 %v1505, %v1504
    %v1638 = vpack.c.b16 %v1507, %v1506
    %v1639 = vpack.c.b16 %v1509, %v1508
    %v1640 = vpack.c.b16 %v1511, %v1510
    %v1641 = vpack.c.b16 %v1513, %v1512
    %1770 = vmatprep.subr.bf16.mxu0 0
    %1771 = vmatpush1.bf16.msra.mxu0 %v1521
    %1772 = vmatprep.subr.bf16.mxu0 0
    %1773 = vmatpush1.bf16.msra.mxu0 %v1520
    %1774 = vmatprep.subr.bf16.mxu0 0
    %1775 = vmatpush1.bf16.msra.mxu0 %v1519
    %1776 = vmatprep.subr.bf16.mxu0 0
    %1777 = vmatpush1.bf16.msra.mxu0 %v1518
    %1778 = vmatprep.subr.bf16.mxu0 0
    %1779 = vmatpush1.bf16.msra.mxu0 %v1517
    %1780 = vmatprep.subr.bf16.mxu0 0
    %1781 = vmatpush1.bf16.msra.mxu0 %v1516
    %1782 = vmatprep.subr.bf16.mxu0 0
    %1783 = vmatpush1.bf16.msra.mxu0 %v1515
    %1784 = vmatprep.subr.bf16.mxu0 0
    %1785 = vmatpush1.bf16.msra.mxu0 %v1514
    %1786 = vmatprep.subr.bf16.mxu0 0
    %1787 = vmatpush2.bf16.msra.mxu0 %v1529
    %1788 = vmatprep.subr.bf16.mxu0 0
    %1789 = vmatpush2.bf16.msra.mxu0 %v1528
    %1790 = vmatprep.subr.bf16.mxu0 0
    %1791 = vmatpush2.bf16.msra.mxu0 %v1527
    %1792 = vmatprep.subr.bf16.mxu0 0
    %1793 = vmatpush2.bf16.msra.mxu0 %v1526
    %1794 = vmatprep.subr.bf16.mxu0 0
    %1795 = vmatpush2.bf16.msra.mxu0 %v1525
    %1796 = vmatprep.subr.bf16.mxu0 0
    %1797 = vmatpush2.bf16.msra.mxu0 %v1524
    %1798 = vmatprep.subr.bf16.mxu0 0
    %1799 = vmatpush2.bf16.msra.mxu0 %v1523
    %1800 = vmatprep.subr.bf16.mxu0 0
    %1801 = vmatpush2.bf16.msra.mxu0 %v1522
    %1802 = vmatprep.mubr.bf16.mxu0 %v724
    %1803 = vmatmul.mubr.bf16.gmra.mxu0 %v723
    %v1804 = vpop.f32.mrf.mxu0
    %v1805 = vadd.f32 %v1000, %v1804
    %v1806 = vpop.f32.mrf.mxu0
    %v1807 = vpop.f32.mrf.mxu0
    %v1808 = vadd.f32 %v1000, %v1807
    %v1809 = vpop.f32.mrf.mxu0
    %1810 = vdwg.mxu0
    %1811 = vmatprep.subr.bf16.mxu0 0
    %1812 = vmatpush1.bf16.msra.mxu0 %v1537
    %1813 = vmatprep.subr.bf16.mxu0 0
    %1814 = vmatpush1.bf16.msra.mxu0 %v1536
    %1815 = vmatprep.subr.bf16.mxu0 0
    %1816 = vmatpush1.bf16.msra.mxu0 %v1535
    %1817 = vmatprep.subr.bf16.mxu0 0
    %1818 = vmatpush1.bf16.msra.mxu0 %v1534
    %1819 = vmatprep.subr.bf16.mxu0 0
    %1820 = vmatpush1.bf16.msra.mxu0 %v1533
    %1821 = vmatprep.subr.bf16.mxu0 0
    %1822 = vmatpush1.bf16.msra.mxu0 %v1532
    %1823 = vmatprep.subr.bf16.mxu0 0
    %1824 = vmatpush1.bf16.msra.mxu0 %v1531
    %1825 = vmatprep.subr.bf16.mxu0 0
    %1826 = vmatpush1.bf16.msra.mxu0 %v1530
    %1827 = vmatprep.subr.bf16.mxu0 0
    %1828 = vmatpush2.bf16.msra.mxu0 %v1545
    %1829 = vmatprep.subr.bf16.mxu0 0
    %1830 = vmatpush2.bf16.msra.mxu0 %v1544
    %1831 = vmatprep.subr.bf16.mxu0 0
    %1832 = vmatpush2.bf16.msra.mxu0 %v1543
    %1833 = vmatprep.subr.bf16.mxu0 0
    %1834 = vmatpush2.bf16.msra.mxu0 %v1542
    %1835 = vmatprep.subr.bf16.mxu0 0
    %1836 = vmatpush2.bf16.msra.mxu0 %v1541
    %1837 = vmatprep.subr.bf16.mxu0 0
    %1838 = vmatpush2.bf16.msra.mxu0 %v1540
    %1839 = vmatprep.subr.bf16.mxu0 0
    %1840 = vmatpush2.bf16.msra.mxu0 %v1539
    %1841 = vmatprep.subr.bf16.mxu0 0
    %1842 = vmatpush2.bf16.msra.mxu0 %v1538
    %1843 = vmatprep.mubr.bf16.mxu0 %v726
    %1844 = vmatmul.mubr.bf16.gmra.mxu0 %v725
    %v1845 = vpop.f32.mrf.mxu0
    %v1846 = vadd.f32 %v1805, %v1845
    %v1847 = vpop.f32.mrf.mxu0
    %v1848 = vpop.f32.mrf.mxu0
    %v1849 = vadd.f32 %v1808, %v1848
    %v1850 = vpop.f32.mrf.mxu0
    %1851 = vdwg.mxu0
    %1852 = vmatprep.subr.bf16.mxu0 0
    %1853 = vmatpush1.bf16.msra.mxu0 %v1553
    %1854 = vmatprep.subr.bf16.mxu0 0
    %1855 = vmatpush1.bf16.msra.mxu0 %v1552
    %1856 = vmatprep.subr.bf16.mxu0 0
    %1857 = vmatpush1.bf16.msra.mxu0 %v1551
    %1858 = vmatprep.subr.bf16.mxu0 0
    %1859 = vmatpush1.bf16.msra.mxu0 %v1550
    %1860 = vmatprep.subr.bf16.mxu0 0
    %1861 = vmatpush1.bf16.msra.mxu0 %v1549
    %1862 = vmatprep.subr.bf16.mxu0 0
    %1863 = vmatpush1.bf16.msra.mxu0 %v1548
    %1864 = vmatprep.subr.bf16.mxu0 0
    %1865 = vmatpush1.bf16.msra.mxu0 %v1547
    %1866 = vmatprep.subr.bf16.mxu0 0
    %1867 = vmatpush1.bf16.msra.mxu0 %v1546
    %1868 = vmatprep.subr.bf16.mxu0 0
    %1869 = vmatpush2.bf16.msra.mxu0 %v1561
    %1870 = vmatprep.subr.bf16.mxu0 0
    %1871 = vmatpush2.bf16.msra.mxu0 %v1560
    %1872 = vmatprep.subr.bf16.mxu0 0
    %1873 = vmatpush2.bf16.msra.mxu0 %v1559
    %1874 = vmatprep.subr.bf16.mxu0 0
    %1875 = vmatpush2.bf16.msra.mxu0 %v1558
    %1876 = vmatprep.subr.bf16.mxu0 0
    %1877 = vmatpush2.bf16.msra.mxu0 %v1557
    %1878 = vmatprep.subr.bf16.mxu0 0
    %1879 = vmatpush2.bf16.msra.mxu0 %v1556
    %1880 = vmatprep.subr.bf16.mxu0 0
    %1881 = vmatpush2.bf16.msra.mxu0 %v1555
    %1882 = vmatprep.subr.bf16.mxu0 0
    %1883 = vmatpush2.bf16.msra.mxu0 %v1554
    %1884 = vmatprep.mubr.bf16.mxu0 %v728
    %1885 = vmatmul.mubr.bf16.gmra.mxu0 %v727
    %v1886 = vpop.f32.mrf.mxu0
    %v1887 = vadd.f32 %v1846, %v1886
    %v1888 = vpop.f32.mrf.mxu0
    %v1889 = vpop.f32.mrf.mxu0
    %v1890 = vadd.f32 %v1849, %v1889
    %v1891 = vpop.f32.mrf.mxu0
    %1892 = vdwg.mxu0
    %1893 = vmatprep.subr.bf16.mxu0 0
    %1894 = vmatpush1.bf16.msra.mxu0 %v1569
    %1895 = vmatprep.subr.bf16.mxu0 0
    %1896 = vmatpush1.bf16.msra.mxu0 %v1568
    %1897 = vmatprep.subr.bf16.mxu0 0
    %1898 = vmatpush1.bf16.msra.mxu0 %v1567
    %1899 = vmatprep.subr.bf16.mxu0 0
    %1900 = vmatpush1.bf16.msra.mxu0 %v1566
    %1901 = vmatprep.subr.bf16.mxu0 0
    %1902 = vmatpush1.bf16.msra.mxu0 %v1565
    %1903 = vmatprep.subr.bf16.mxu0 0
    %1904 = vmatpush1.bf16.msra.mxu0 %v1564
    %1905 = vmatprep.subr.bf16.mxu0 0
    %1906 = vmatpush1.bf16.msra.mxu0 %v1563
    %1907 = vmatprep.subr.bf16.mxu0 0
    %1908 = vmatpush1.bf16.msra.mxu0 %v1562
    %1909 = vmatprep.subr.bf16.mxu0 0
    %1910 = vmatpush2.bf16.msra.mxu0 %v1577
    %1911 = vmatprep.subr.bf16.mxu0 0
    %1912 = vmatpush2.bf16.msra.mxu0 %v1576
    %1913 = vmatprep.subr.bf16.mxu0 0
    %1914 = vmatpush2.bf16.msra.mxu0 %v1575
    %1915 = vmatprep.subr.bf16.mxu0 0
    %1916 = vmatpush2.bf16.msra.mxu0 %v1574
    %1917 = vmatprep.subr.bf16.mxu0 0
    %1918 = vmatpush2.bf16.msra.mxu0 %v1573
    %1919 = vmatprep.subr.bf16.mxu0 0
    %1920 = vmatpush2.bf16.msra.mxu0 %v1572
    %1921 = vmatprep.subr.bf16.mxu0 0
    %1922 = vmatpush2.bf16.msra.mxu0 %v1571
    %1923 = vmatprep.subr.bf16.mxu0 0
    %1924 = vmatpush2.bf16.msra.mxu0 %v1570
    %1925 = vmatprep.mubr.bf16.mxu0 %v730
    %1926 = vmatmul.mubr.bf16.gmra.mxu0 %v729
    %v1927 = vpop.f32.mrf.mxu0
    %v1928 = vadd.f32 %v1887, %v1927
    %v1929 = vpop.f32.mrf.mxu0
    %v1930 = vpop.f32.mrf.mxu0
    %v1931 = vadd.f32 %v1890, %v1930
    %v1932 = vpop.f32.mrf.mxu0
    %1933 = vdwg.mxu0
    %1934 = vmatprep.subr.bf16.mxu0 0
    %1935 = vmatpush1.bf16.msra.mxu0 %v1585
    %1936 = vmatprep.subr.bf16.mxu0 0
    %1937 = vmatpush1.bf16.msra.mxu0 %v1584
    %1938 = vmatprep.subr.bf16.mxu0 0
    %1939 = vmatpush1.bf16.msra.mxu0 %v1583
    %1940 = vmatprep.subr.bf16.mxu0 0
    %1941 = vmatpush1.bf16.msra.mxu0 %v1582
    %1942 = vmatprep.subr.bf16.mxu0 0
    %1943 = vmatpush1.bf16.msra.mxu0 %v1581
    %1944 = vmatprep.subr.bf16.mxu0 0
    %1945 = vmatpush1.bf16.msra.mxu0 %v1580
    %1946 = vmatprep.subr.bf16.mxu0 0
    %1947 = vmatpush1.bf16.msra.mxu0 %v1579
    %1948 = vmatprep.subr.bf16.mxu0 0
    %1949 = vmatpush1.bf16.msra.mxu0 %v1578
    %1950 = vmatprep.subr.bf16.mxu0 0
    %1951 = vmatpush2.bf16.msra.mxu0 %v1593
    %1952 = vmatprep.subr.bf16.mxu0 0
    %1953 = vmatpush2.bf16.msra.mxu0 %v1592
    %1954 = vmatprep.subr.bf16.mxu0 0
    %1955 = vmatpush2.bf16.msra.mxu0 %v1591
    %1956 = vmatprep.subr.bf16.mxu0 0
    %1957 = vmatpush2.bf16.msra.mxu0 %v1590
    %1958 = vmatprep.subr.bf16.mxu0 0
    %1959 = vmatpush2.bf16.msra.mxu0 %v1589
    %1960 = vmatprep.subr.bf16.mxu0 0
    %1961 = vmatpush2.bf16.msra.mxu0 %v1588
    %1962 = vmatprep.subr.bf16.mxu0 0
    %1963 = vmatpush2.bf16.msra.mxu0 %v1587
    %1964 = vmatprep.subr.bf16.mxu0 0
    %1965 = vmatpush2.bf16.msra.mxu0 %v1586
    %1966 = vmatprep.mubr.bf16.mxu0 %v732
    %1967 = vmatmul.mubr.bf16.gmra.mxu0 %v731
    %v1968 = vpop.f32.mrf.mxu0
    %v1969 = vadd.f32 %v1928, %v1968
    %v1970 = vpop.f32.mrf.mxu0
    %v1971 = vpop.f32.mrf.mxu0
    %v1972 = vadd.f32 %v1931, %v1971
    %v1973 = vpop.f32.mrf.mxu0
    %1974 = vdwg.mxu0
    %1975 = vmatprep.subr.bf16.mxu0 0
    %1976 = vmatpush1.bf16.msra.mxu0 %v1601
    %1977 = vmatprep.subr.bf16.mxu0 0
    %1978 = vmatpush1.bf16.msra.mxu0 %v1600
    %1979 = vmatprep.subr.bf16.mxu0 0
    %1980 = vmatpush1.bf16.msra.mxu0 %v1599
    %1981 = vmatprep.subr.bf16.mxu0 0
    %1982 = vmatpush1.bf16.msra.mxu0 %v1598
    %1983 = vmatprep.subr.bf16.mxu0 0
    %1984 = vmatpush1.bf16.msra.mxu0 %v1597
    %1985 = vmatprep.subr.bf16.mxu0 0
    %1986 = vmatpush1.bf16.msra.mxu0 %v1596
    %1987 = vmatprep.subr.bf16.mxu0 0
    %1988 = vmatpush1.bf16.msra.mxu0 %v1595
    %1989 = vmatprep.subr.bf16.mxu0 0
    %1990 = vmatpush1.bf16.msra.mxu0 %v1594
    %1991 = vmatprep.subr.bf16.mxu0 0
    %1992 = vmatpush2.bf16.msra.mxu0 %v1609
    %1993 = vmatprep.subr.bf16.mxu0 0
    %1994 = vmatpush2.bf16.msra.mxu0 %v1608
    %1995 = vmatprep.subr.bf16.mxu0 0
    %1996 = vmatpush2.bf16.msra.mxu0 %v1607
    %1997 = vmatprep.subr.bf16.mxu0 0
    %1998 = vmatpush2.bf16.msra.mxu0 %v1606
    %1999 = vmatprep.subr.bf16.mxu0 0
    %2000 = vmatpush2.bf16.msra.mxu0 %v1605
    %2001 = vmatprep.subr.bf16.mxu0 0
    %2002 = vmatpush2.bf16.msra.mxu0 %v1604
    %2003 = vmatprep.subr.bf16.mxu0 0
    %2004 = vmatpush2.bf16.msra.mxu0 %v1603
    %2005 = vmatprep.subr.bf16.mxu0 0
    %2006 = vmatpush2.bf16.msra.mxu0 %v1602
    %2007 = vmatprep.mubr.bf16.mxu0 %v734
    %2008 = vmatmul.mubr.bf16.gmra.mxu0 %v733
    %v2009 = vpop.f32.mrf.mxu0
    %v2010 = vadd.f32 %v1969, %v2009
    %v2011 = vpop.f32.mrf.mxu0
    %v2012 = vpop.f32.mrf.mxu0
    %v2013 = vadd.f32 %v1972, %v2012
    %v2014 = vpop.f32.mrf.mxu0
    %2015 = vdwg.mxu0
    %2016 = vmatprep.subr.bf16.mxu0 0
    %2017 = vmatpush1.bf16.msra.mxu0 %v1617
    %2018 = vmatprep.subr.bf16.mxu0 0
    %2019 = vmatpush1.bf16.msra.mxu0 %v1616
    %2020 = vmatprep.subr.bf16.mxu0 0
    %2021 = vmatpush1.bf16.msra.mxu0 %v1615
    %2022 = vmatprep.subr.bf16.mxu0 0
    %2023 = vmatpush1.bf16.msra.mxu0 %v1614
    %2024 = vmatprep.subr.bf16.mxu0 0
    %2025 = vmatpush1.bf16.msra.mxu0 %v1613
    %2026 = vmatprep.subr.bf16.mxu0 0
    %2027 = vmatpush1.bf16.msra.mxu0 %v1612
    %2028 = vmatprep.subr.bf16.mxu0 0
    %2029 = vmatpush1.bf16.msra.mxu0 %v1611
    %2030 = vmatprep.subr.bf16.mxu0 0
    %2031 = vmatpush1.bf16.msra.mxu0 %v1610
    %2032 = vmatprep.subr.bf16.mxu0 0
    %2033 = vmatpush2.bf16.msra.mxu0 %v1625
    %2034 = vmatprep.subr.bf16.mxu0 0
    %2035 = vmatpush2.bf16.msra.mxu0 %v1624
    %2036 = vmatprep.subr.bf16.mxu0 0
    %2037 = vmatpush2.bf16.msra.mxu0 %v1623
    %2038 = vmatprep.subr.bf16.mxu0 0
    %2039 = vmatpush2.bf16.msra.mxu0 %v1622
    %2040 = vmatprep.subr.bf16.mxu0 0
    %2041 = vmatpush2.bf16.msra.mxu0 %v1621
    %2042 = vmatprep.subr.bf16.mxu0 0
    %2043 = vmatpush2.bf16.msra.mxu0 %v1620
    %2044 = vmatprep.subr.bf16.mxu0 0
    %2045 = vmatpush2.bf16.msra.mxu0 %v1619
    %2046 = vmatprep.subr.bf16.mxu0 0
    %2047 = vmatpush2.bf16.msra.mxu0 %v1618
    %2048 = vmatprep.mubr.bf16.mxu0 %v736
    %2049 = vmatmul.mubr.bf16.gmra.mxu0 %v735
    %v2050 = vpop.f32.mrf.mxu0
    %v2051 = vadd.f32 %v2010, %v2050
    %v2052 = vpop.f32.mrf.mxu0
    %v2053 = vpop.f32.mrf.mxu0
    %v2054 = vadd.f32 %v2013, %v2053
    %v2055 = vpop.f32.mrf.mxu0
    %2056 = vdwg.mxu0
    %2057 = vmatprep.subr.bf16.mxu0 0
    %2058 = vmatpush1.bf16.msra.mxu0 %v1633
    %2059 = vmatprep.subr.bf16.mxu0 0
    %2060 = vmatpush1.bf16.msra.mxu0 %v1632
    %2061 = vmatprep.subr.bf16.mxu0 0
    %2062 = vmatpush1.bf16.msra.mxu0 %v1631
    %2063 = vmatprep.subr.bf16.mxu0 0
    %2064 = vmatpush1.bf16.msra.mxu0 %v1630
    %2065 = vmatprep.subr.bf16.mxu0 0
    %2066 = vmatpush1.bf16.msra.mxu0 %v1629
    %2067 = vmatprep.subr.bf16.mxu0 0
    %2068 = vmatpush1.bf16.msra.mxu0 %v1628
    %2069 = vmatprep.subr.bf16.mxu0 0
    %2070 = vmatpush1.bf16.msra.mxu0 %v1627
    %2071 = vmatprep.subr.bf16.mxu0 0
    %2072 = vmatpush1.bf16.msra.mxu0 %v1626
    %2073 = vmatprep.subr.bf16.mxu0 0
    %2074 = vmatpush2.bf16.msra.mxu0 %v1641
    %2075 = vmatprep.subr.bf16.mxu0 0
    %2076 = vmatpush2.bf16.msra.mxu0 %v1640
    %2077 = vmatprep.subr.bf16.mxu0 0
    %2078 = vmatpush2.bf16.msra.mxu0 %v1639
    %2079 = vmatprep.subr.bf16.mxu0 0
    %2080 = vmatpush2.bf16.msra.mxu0 %v1638
    %2081 = vmatprep.subr.bf16.mxu0 0
    %2082 = vmatpush2.bf16.msra.mxu0 %v1637
    %2083 = vmatprep.subr.bf16.mxu0 0
    %2084 = vmatpush2.bf16.msra.mxu0 %v1636
    %2085 = vmatprep.subr.bf16.mxu0 0
    %2086 = vmatpush2.bf16.msra.mxu0 %v1635
    %2087 = vmatprep.subr.bf16.mxu0 0
    %2088 = vmatpush2.bf16.msra.mxu0 %v1634
    %2089 = vmatprep.mubr.bf16.mxu0 %v738
    %2090 = vmatmul.mubr.bf16.gmra.mxu0 %v737
    %v2091 = vpop.f32.mrf.mxu0
    %v2092 = vadd.f32 %v2051, %v2091
    %v2093 = vpop.f32.mrf.mxu0
    %v2094 = vpop.f32.mrf.mxu0
    %v2095 = vadd.f32 %v2054, %v2094
    %v2096 = vpop.f32.mrf.mxu0
    %2097 = vdwg.mxu0
    %v2098 = vmul.f32 %v2092, 0.1
    %v2099 = vmul.f32 %v2095, 0.1
    %v2100 = vtanh.pop %v2098
    %v2101 = vtanh.pop %v2099
    %2102 = vst [vmem:[#allocation7] sm:$0xff] %v2100
    %2103 = vst [vmem:[#allocation7 + $0x8] sm:$0xff] %v2101
    // Predicated region
    $region26: #{net_forward.1} parent=1 // pred_check
      _
    $region27: #{net_forward.1} parent=1 // pred_check_branch
      %2105 = sbr.rel (0) target = $region29
    $region28: #{net_forward.1} parent=1 // pred_region
      %s2107 = ssub.s32 256, 256
      %2108 = vsyncadd [#allocation4], %s2107
      %s2109 = sshll.u32 [#allocation7], 4
      %s2110 = int_to_ptr.vmem [resolvable:$true] %s2109
      %2115 = dma.vmem_to_hbm [thread:$0]  %s2110, 256, %s4, [#allocation4], 128, 128, 8
    $region29: #{net_forward.1} parent=1 // pred_fallthru
      _
    // Predicated region
    $region30: #{net_forward.1} parent=1 // pred_check
      _
    $region31: #{net_forward.1} parent=1 // pred_check_branch
      %2117 = sbr.rel (0) target = $region33
    $region32: #{net_forward.1} parent=1 // pred_region
      %2118 = dma.done [#allocation4], 256
    $region33: #{net_forward.1} parent=1 // pred_fallthru
      _
    %2119 = vsyncpa [#allocation3], 1
    %2120 = vsyncpa [#allocation6], 1
    %2121 = vsyncpa [#allocation4], 1

</llo_original>
